<compile_context>
chip_gen: v7x
topology: tpu7x:2x2x1
jax: 0.10.0
libtpu: 0.0.40
codegen_flags: <defaults>
</compile_context>

<pallas_src>
from functools import partial

import jax
import jax.numpy as jnp
from jax.experimental import pallas as pl
from jax.experimental.pallas import tpu as pltpu


def _sigmoid(z):
    # sigmoid via tanh: one EUP op instead of exp + VALU divide, full f32 accuracy.
    return 0.5 * (jnp.tanh(0.5 * z) + 1.0)


def _channel_mlp(ch_max, ch_avg, w1t, w2, C, Cr):
    """sigmoid(W2 @ (relu(W1 @ max) + relu(W1 @ avg))) for one batch element -> (C, 1)."""
    if C >= 128:
        # Production channel counts: run the two small GEMMs on the otherwise-idle MXU.
        pooled2 = jnp.concatenate([ch_max, ch_avg], axis=1)                 # (C, 2)
        h2 = jax.lax.dot_general(w1t, pooled2, (((0,), (0,)), ((), ())),
                                 preferred_element_type=jnp.float32)        # (Cr, 2)
        h2 = jnp.maximum(h2, 0.0)
        h = h2[:, 0:1] + h2[:, 1:2]                                         # (Cr, 1)
        pre = jax.lax.dot_general(w2, h, (((1,), (0,)), ((), ())),
                                  preferred_element_type=jnp.float32)       # (C, 1)
        return _sigmoid(pre)
    # Tiny C / Cr (e.g. 32 / 2): broadcast-multiply + reduce on the VPU; an MXU matmul
    # would be pure tile padding at these sizes.
    h = (jnp.maximum(jnp.sum(w1t * ch_max, axis=0, keepdims=True), 0.0) +
         jnp.maximum(jnp.sum(w1t * ch_avg, axis=0, keepdims=True), 0.0))    # (1, Cr)
    return _sigmoid(jnp.sum(w2 * h, axis=1, keepdims=True))                 # (C, 1)


def cbam_kernel(x_ref, w1t_ref, w2_ref, wsp_ref, o_ref, pad_ref,
                *, BB, C, Cr, H, W, K, MARG):
    HW = H * W
    P = K // 2
    f32 = jnp.float32

    w1t = w1t_ref[...].astype(f32)                          # (C, Cr) == W1^T
    w2 = w2_ref[...].astype(f32)                            # (C, Cr) == W2

    # Zero only the two margin slabs of the conv scratch; the interior is fully
    # overwritten below.  (Done every step: cheap, and safe when the parallel grid is
    # split across TensorCores, each with its own scratch instance.)
    pad_ref[:, 0:MARG] = jnp.zeros((2 * BB, MARG), f32)
    pad_ref[:, MARG + HW:MARG + HW + MARG] = jnp.zeros((2 * BB, MARG), f32)

    # ------------- per-batch channel attention + spatial pooling into scratch -------------
    ch_atts = []
    for b in range(BB):                                     # static unroll, BB is small
        xb = x_ref[b].astype(f32)                           # (C, HW), lane-dense
        ch_max = jnp.max(xb, axis=1, keepdims=True)         # (C, 1)  AdaptiveMaxPool2d(1)
        ch_avg = jnp.mean(xb, axis=1, keepdims=True)        # (C, 1)  AdaptiveAvgPool2d(1)
        ch_att = _channel_mlp(ch_max, ch_avg, w1t, w2, C, Cr)   # (C, 1)
        ch_atts.append(ch_att)

        xc = xb * ch_att                                    # channel-scaled slab
        pad_ref[b:b + 1, MARG:MARG + HW] = jnp.max(xc, axis=0, keepdims=True)
        pad_ref[BB + b:BB + b + 1, MARG:MARG + HW] = jnp.mean(xc, axis=0, keepdims=True)

    # ------------- 7x7 "same" conv on the stacked (2*BB, HW) pooled maps -------------
    # column index of every flat position (to mask column wrap of flat shifts)
    pos = jax.lax.broadcasted_iota(jnp.int32, (1, HW), 1)
    if (W & (W - 1)) == 0:
        col = jnp.bitwise_and(pos, W - 1)                   # W is a power of two
    else:
        row = jnp.zeros_like(pos)                           # fallback, O(H) compares
        for j in range(1, H):
            row = row + (pos >= j * W).astype(jnp.int32)
        col = pos - W * row

    col_ok = {}
    for kx in range(K):
        dx = kx - P
        if dx < 0:
            col_ok[kx] = col >= -dx
        elif dx > 0:
            col_ok[kx] = col < (W - dx)

    is_max_row = jax.lax.broadcasted_iota(jnp.int32, (2 * BB, 1), 0) < BB

    acc = jnp.zeros((2 * BB, HW), f32)
    for kx in range(K):                                     # outer: column offset dx
        dx = kx - P
        part = jnp.zeros((2 * BB, HW), f32)
        for ky in range(K):                                 # inner: row offset dy
            dy = ky - P
            s = dy * W + dx                                 # flat shift of this tap
            w_max = wsp_ref[ky * K + kx]                    # SMEM scalar taps
            w_avg = wsp_ref[K * K + ky * K + kx]
            wcol = jnp.where(is_max_row, w_max, w_avg)      # (2*BB, 1) per-tap weights
            # one combined (2*BB)-row slice per tap (single lane rotate)
            part = part + pad_ref[:, MARG + s:MARG + s + HW] * wcol
        if dx != 0:                                         # one column mask per dx
            part = jnp.where(col_ok[kx], part, 0.0)
        acc = acc + part

    conv = acc[0:BB, :] + acc[BB:2 * BB, :]                 # (BB, HW)
    sp_att = _sigmoid(conv)                                 # (BB, HW)

    # ------------- output: x * ch_att * sp_att (re-read x; keep live values small) -------
    for b in range(BB):
        xb = x_ref[b].astype(f32)
        o_ref[b] = (xb * ch_atts[b] * sp_att[b:b + 1, :]).astype(o_ref.dtype)


def _pick_block_batch(B, C, HW, itemsize):
    """Batch elements per grid step: target ~2 MiB x-tiles (0.5-4 MiB sweet spot),
    keep >= 2 grid steps when B >= 2 (so v7x's two TensorCores both get work),
    keep BB a divisor of B, and bound the static per-batch unroll."""
    target_bytes = 2 << 20
    per_b = max(1, C * HW * itemsize)
    bb = max(1, min(B, target_bytes // per_b))
    if B >= 2:
        bb = min(bb, B // 2)
    bb = max(1, min(bb, 16))
    while B % bb:
        bb -= 1
    return bb


def cbam_forward(x, mlp_w1, mlp_w2, conv_w):
    """x: (B, C, H, W); mlp_w1: (C//r, C); mlp_w2: (C, C//r); conv_w: (1, 2, K, K)."""
    B, C, H, W = x.shape
    Cr = mlp_w1.shape[0]
    K = conv_w.shape[-1]
    P = K // 2
    HW = H * W
    MARG = ((P * W + P + 127) // 128) * 128                 # lane-tile-aligned zero margin

    itemsize = jnp.dtype(x.dtype).itemsize
    BB = _pick_block_batch(B, C, HW, itemsize)
    grid = (B // BB,)

    x_flat = x.reshape(B, C, HW)                            # lane-dense last dim
    w1t = jnp.transpose(mlp_w1)                             # (C, Cr) == W1^T
    w2 = mlp_w2                                             # (C, Cr)
    wsp = conv_w.reshape(-1).astype(jnp.float32)            # (2*K*K,) conv taps in SMEM

    # VMEM budget: double-buffered in/out tiles + scratch + resident weights.  Raise the
    # scoped limit explicitly (v5e default is 16 MiB) but stay well under v7x's 64 MiB.
    tile_bytes = BB * C * HW * itemsize
    pad_bytes = (2 * BB) * (HW + 2 * MARG) * 4
    vmem_need = 4 * tile_bytes + pad_bytes + 4 * (2 * C * Cr * 4) + (1 << 20)
    vmem_limit = int(min(max(2 * vmem_need, 32 << 20), 48 << 20))

    flops = B * (6 * C * HW + 4 * K * K * HW + 6 * C * Cr)
    transcendentals = B * (C + HW)
    bytes_accessed = int(itemsize * 2 * B * C * HW + 4 * (2 * C * Cr + 2 * K * K))

    kernel = partial(cbam_kernel, BB=BB, C=C, Cr=Cr, H=H, W=W, K=K, MARG=MARG)
    out_flat = pl.pallas_call(
        kernel,
        out_shape=jax.ShapeDtypeStruct((B, C, HW), x.dtype),
        grid_spec=pltpu.PrefetchScalarGridSpec(
            num_scalar_prefetch=0,
            grid=grid,
            in_specs=[
                pl.BlockSpec((BB, C, HW), lambda g: (g, 0, 0)),       # x tile, lane-dense
                pl.BlockSpec((C, Cr), lambda g: (0, 0)),              # MLP W1^T (resident)
                pl.BlockSpec((C, Cr), lambda g: (0, 0)),              # MLP W2   (resident)
                pl.BlockSpec(memory_space=pltpu.MemorySpace.SMEM),    # conv taps (scalars)
            ],
            out_specs=pl.BlockSpec((BB, C, HW), lambda g: (g, 0, 0)),
            scratch_shapes=[pltpu.VMEM((2 * BB, HW + 2 * MARG), jnp.float32)],
        ),
        compiler_params=pltpu.CompilerParams(
            dimension_semantics=("parallel",),
            vmem_limit_bytes=vmem_limit),
        cost_estimate=pl.CostEstimate(
            flops=flops, transcendentals=transcendentals,
            bytes_accessed=bytes_accessed),
    )(x_flat, w1t, w2, wsp)
    return out_flat.reshape(B, C, H, W)


def cbam_reference(x, mlp_w1, mlp_w2, conv_w):
    """Pure-JAX reference mirroring the PyTorch CBAMLayer.forward."""
    hp = jax.lax.Precision.HIGHEST
    ch_max = jnp.max(x, axis=(2, 3))                        # (B, C)
    ch_avg = jnp.mean(x, axis=(2, 3))                       # (B, C)

    def mlp(v):
        h = jnp.maximum(jnp.dot(v, mlp_w1.T, precision=hp), 0.0)
        return jnp.dot(h, mlp_w2.T, precision=hp)

    ch_att = jax.nn.sigmoid(mlp(ch_max) + mlp(ch_avg))[:, :, None, None]
    xc = x * ch_att
    sp_max = jnp.max(xc, axis=1, keepdims=True)
    sp_avg = jnp.mean(xc, axis=1, keepdims=True)
    sp_in = jnp.concatenate([sp_max, sp_avg], axis=1)       # (B, 2, H, W)
    conv = jax.lax.conv_general_dilated(
        sp_in, conv_w, window_strides=(1, 1), padding="SAME",
        dimension_numbers=("NCHW", "OIHW", "NCHW"), precision=hp)
    sp_att = jax.nn.sigmoid(conv)
    return xc * sp_att


if __name__ == "__main__":
    def run_case(B, C, H, W, reduction, K, seed):
        Cr = max(C // reduction, 1)
        key = jax.random.PRNGKey(seed)
        kx, k1, k2, kc = jax.random.split(key, 4)
        x = jax.random.normal(kx, (B, C, H, W), jnp.float32)
        mlp_w1 = jax.random.normal(k1, (Cr, C), jnp.float32) * (1.0 / jnp.sqrt(jnp.float32(C)))
        mlp_w2 = jax.random.normal(k2, (C, Cr), jnp.float32) * (1.0 / jnp.sqrt(jnp.float32(Cr)))
        conv_w = jax.random.normal(kc, (1, 2, K, K), jnp.float32) * (1.0 / jnp.sqrt(jnp.float32(2 * K * K)))

        out = jax.block_until_ready(cbam_forward(x, mlp_w1, mlp_w2, conv_w))
        ref = cbam_reference(x, mlp_w1, mlp_w2, conv_w)
        assert out.shape == x.shape
        assert jnp.allclose(out, ref, atol=1e-4, rtol=1e-4), \
            f"mismatch vs reference (B={B} C={C} H={H} W={W})"

    # Primary small config consistent with the module defaults: channel=32 (reduction=16),
    # 16x16 spatial, batch 2, spatial_kernel=7.
    run_case(B=2, C=32, H=16, W=16, reduction=16, K=7, seed=0)
    # Exercises batch blocking (BB=4 per grid step), non-power-of-two W and HW % 128 != 0.
    run_case(B=8, C=32, H=12, W=12, reduction=16, K=7, seed=1)

    print("KERNEL_OK")
</pallas_src>

<mosaic_0001>
module attributes {stable_mosaic.version = 11 : i64} {
  func.func @cbam_kernel(%arg0: i32, %arg1: memref<1x32x256xf32, #tpu.memory_space<vmem>>, %arg2: memref<32x2xf32, #tpu.memory_space<vmem>>, %arg3: memref<32x2xf32, #tpu.memory_space<vmem>>, %arg4: memref<98xf32, #tpu.memory_space<smem>>, %arg5: memref<1x32x256xf32, #tpu.memory_space<vmem>>, %arg6: memref<2x512xf32, #tpu.memory_space<vmem>>) attributes {dimension_semantics = [#tpu.dimension_semantics<parallel>], iteration_bounds = array<i64: 2>, scalar_prefetch = 0 : i64, scratch_operands = 1 : i64, tpu.core_type = #tpu.core_type<tc>, window_params = [{transform_indices = @transform_0, window_bounds = array<i64: 1, 32, 256>}, {pipeline_mode = #tpu.pipeline_mode<synchronous>, transform_indices = @transform_1, window_bounds = array<i64: 32, 2>}, {pipeline_mode = #tpu.pipeline_mode<synchronous>, transform_indices = @transform_2, window_bounds = array<i64: 32, 2>}, {transform_indices = @transform_3, window_bounds = array<i64: 98>}, {transform_indices = @transform_4, window_bounds = array<i64: 1, 32, 256>}]} {
    %c0 = arith.constant 0 : index
    %c0_0 = arith.constant 0 : index
    %0 = vector.load %arg2[%c0, %c0_0] : memref<32x2xf32, #tpu.memory_space<vmem>>, vector<32x2xf32>
    %c0_1 = arith.constant 0 : index
    %c0_2 = arith.constant 0 : index
    %1 = vector.load %arg3[%c0_1, %c0_2] : memref<32x2xf32, #tpu.memory_space<vmem>>, vector<32x2xf32>
    %cst = arith.constant 0.000000e+00 : f32
    %2 = vector.broadcast %cst : f32 to vector<2x128xf32>
    %c0_3 = arith.constant 0 : index
    %c0_4 = arith.constant 0 : index
    %3 = vector.load %arg6[%c0_3, %c0_4] : memref<2x512xf32, #tpu.memory_space<vmem>>, vector<2x128xf32>
    tpu.vector_store %arg6[%c0_3, %c0_4], %2 {strides = array<i32>} : memref<2x512xf32, #tpu.memory_space<vmem>>, vector<2x128xf32>,
    %cst_5 = arith.constant 0.000000e+00 : f32
    %4 = vector.broadcast %cst_5 : f32 to vector<2x128xf32>
    %c0_6 = arith.constant 0 : index
    %c384 = arith.constant 384 : index
    %5 = vector.load %arg6[%c0_6, %c384] : memref<2x512xf32, #tpu.memory_space<vmem>>, vector<2x128xf32>
    tpu.vector_store %arg6[%c0_6, %c384], %4 {strides = array<i32>} : memref<2x512xf32, #tpu.memory_space<vmem>>, vector<2x128xf32>,
    %c0_7 = arith.constant 0 : index
    %c0_8 = arith.constant 0 : index
    %c0_9 = arith.constant 0 : index
    %6 = vector.load %arg1[%c0_7, %c0_8, %c0_9] : memref<1x32x256xf32, #tpu.memory_space<vmem>>, vector<1x32x256xf32>
    %7 = vector.shape_cast %6 : vector<1x32x256xf32> to vector<32x256xf32>
    %cst_10 = arith.constant dense<0xFF800000> : vector<32xf32>
    %8 = vector.multi_reduction <maximumf>, %7, %cst_10 [1] : vector<32x256xf32> to vector<32xf32>
    %9 = vector.shape_cast %8 : vector<32xf32> to vector<32x1xf32>
    %cst_11 = arith.constant dense<0.000000e+00> : vector<32xf32>
    %10 = vector.multi_reduction <add>, %7, %cst_11 [1] : vector<32x256xf32> to vector<32xf32>
    %11 = vector.shape_cast %10 : vector<32xf32> to vector<32x1xf32>
    %cst_12 = arith.constant 2.560000e+02 : f32
    %12 = vector.broadcast %cst_12 : f32 to vector<32x1xf32>
    %13 = arith.divf %11, %12 : vector<32x1xf32>
    %14 = vector.broadcast %9 : vector<32x1xf32> to vector<32x2xf32>
    %15 = arith.mulf %0, %14 : vector<32x2xf32>
    %cst_13 = arith.constant dense<0.000000e+00> : vector<2xf32>
    %16 = vector.multi_reduction <add>, %15, %cst_13 [0] : vector<32x2xf32> to vector<2xf32>
    %17 = vector.shape_cast %16 : vector<2xf32> to vector<1x2xf32>
    %cst_14 = arith.constant 0.000000e+00 : f32
    %18 = vector.broadcast %cst_14 : f32 to vector<1x2xf32>
    %19 = arith.maximumf %17, %18 : vector<1x2xf32>
    %20 = vector.broadcast %13 : vector<32x1xf32> to vector<32x2xf32>
    %21 = arith.mulf %0, %20 : vector<32x2xf32>
    %cst_15 = arith.constant dense<0.000000e+00> : vector<2xf32>
    %22 = vector.multi_reduction <add>, %21, %cst_15 [0] : vector<32x2xf32> to vector<2xf32>
    %23 = vector.shape_cast %22 : vector<2xf32> to vector<1x2xf32>
    %cst_16 = arith.constant 0.000000e+00 : f32
    %24 = vector.broadcast %cst_16 : f32 to vector<1x2xf32>
    %25 = arith.maximumf %23, %24 : vector<1x2xf32>
    %26 = arith.addf %19, %25 : vector<1x2xf32>
    %27 = vector.broadcast %26 : vector<1x2xf32> to vector<32x2xf32>
    %28 = arith.mulf %1, %27 : vector<32x2xf32>
    %cst_17 = arith.constant dense<0.000000e+00> : vector<32xf32>
    %29 = vector.multi_reduction <add>, %28, %cst_17 [1] : vector<32x2xf32> to vector<32xf32>
    %30 = vector.shape_cast %29 : vector<32xf32> to vector<32x1xf32>
    %cst_18 = arith.constant 5.000000e-01 : f32
    %31 = vector.broadcast %cst_18 : f32 to vector<32x1xf32>
    %32 = arith.mulf %31, %30 : vector<32x1xf32>
    %33 = math.tanh %32 : vector<32x1xf32>
    %cst_19 = arith.constant 1.000000e+00 : f32
    %34 = vector.broadcast %cst_19 : f32 to vector<32x1xf32>
    %35 = arith.addf %33, %34 : vector<32x1xf32>
    %cst_20 = arith.constant 5.000000e-01 : f32
    %36 = vector.broadcast %cst_20 : f32 to vector<32x1xf32>
    %37 = arith.mulf %36, %35 : vector<32x1xf32>
    %38 = vector.broadcast %37 : vector<32x1xf32> to vector<32x256xf32>
    %39 = arith.mulf %7, %38 : vector<32x256xf32>
    %cst_21 = arith.constant dense<0xFF800000> : vector<256xf32>
    %40 = vector.multi_reduction <maximumf>, %39, %cst_21 [0] : vector<32x256xf32> to vector<256xf32>
    %41 = vector.shape_cast %40 : vector<256xf32> to vector<1x256xf32>
    %c0_22 = arith.constant 0 : index
    %c128 = arith.constant 128 : index
    %42 = vector.load %arg6[%c0_22, %c128] : memref<2x512xf32, #tpu.memory_space<vmem>>, vector<1x256xf32>
    tpu.vector_store %arg6[%c0_22, %c128], %41 {strides = array<i32>} : memref<2x512xf32, #tpu.memory_space<vmem>>, vector<1x256xf32>,
    %cst_23 = arith.constant dense<0.000000e+00> : vector<256xf32>
    %43 = vector.multi_reduction <add>, %39, %cst_23 [0] : vector<32x256xf32> to vector<256xf32>
    %44 = vector.shape_cast %43 : vector<256xf32> to vector<1x256xf32>
    %cst_24 = arith.constant 3.200000e+01 : f32
    %45 = vector.broadcast %cst_24 : f32 to vector<1x256xf32>
    %46 = arith.divf %44, %45 : vector<1x256xf32>
    %c1 = arith.constant 1 : index
    %c128_25 = arith.constant 128 : index
    %47 = vector.load %arg6[%c1, %c128_25] : memref<2x512xf32, #tpu.memory_space<vmem>>, vector<1x256xf32>
    tpu.vector_store %arg6[%c1, %c128_25], %46 {strides = array<i32>} : memref<2x512xf32, #tpu.memory_space<vmem>>, vector<1x256xf32>,
    %48 = tpu.iota {dimensions = array<i32: 1>} : vector<1x256xi32>
    %c15_i32 = arith.constant 15 : i32
    %49 = vector.broadcast %c15_i32 : i32 to vector<1x256xi32>
    %50 = arith.andi %48, %49 : vector<1x256xi32>
    %c3_i32 = arith.constant 3 : i32
    %51 = vector.broadcast %c3_i32 : i32 to vector<1x256xi32>
    %52 = arith.cmpi sge, %50, %51 : vector<1x256xi32>
    %c2_i32 = arith.constant 2 : i32
    %53 = vector.broadcast %c2_i32 : i32 to vector<1x256xi32>
    %54 = arith.cmpi sge, %50, %53 : vector<1x256xi32>
    %c1_i32 = arith.constant 1 : i32
    %55 = vector.broadcast %c1_i32 : i32 to vector<1x256xi32>
    %56 = arith.cmpi sge, %50, %55 : vector<1x256xi32>
    %c15_i32_26 = arith.constant 15 : i32
    %57 = vector.broadcast %c15_i32_26 : i32 to vector<1x256xi32>
    %58 = arith.cmpi slt, %50, %57 : vector<1x256xi32>
    %c14_i32 = arith.constant 14 : i32
    %59 = vector.broadcast %c14_i32 : i32 to vector<1x256xi32>
    %60 = arith.cmpi slt, %50, %59 : vector<1x256xi32>
    %c13_i32 = arith.constant 13 : i32
    %61 = vector.broadcast %c13_i32 : i32 to vector<1x256xi32>
    %62 = arith.cmpi slt, %50, %61 : vector<1x256xi32>
    %63 = tpu.iota {dimensions = array<i32: 0>} : vector<2x1xi32>
    %c1_i32_27 = arith.constant 1 : i32
    %64 = vector.broadcast %c1_i32_27 : i32 to vector<2x1xi32>
    %65 = arith.cmpi slt, %63, %64 : vector<2x1xi32>
    %cst_28 = arith.constant 0.000000e+00 : f32
    %66 = vector.broadcast %cst_28 : f32 to vector<2x256xf32>
    %cst_29 = arith.constant 0.000000e+00 : f32
    %67 = vector.broadcast %cst_29 : f32 to vector<2x256xf32>
    %c0_30 = arith.constant 0 : index
    %68 = memref.load %arg4[%c0_30] : memref<98xf32, #tpu.memory_space<smem>>
    %c49 = arith.constant 49 : index
    %69 = memref.load %arg4[%c49] : memref<98xf32, #tpu.memory_space<smem>>
    %70 = vector.broadcast %68 : f32 to vector<2x1xf32>
    %71 = vector.broadcast %69 : f32 to vector<2x1xf32>
    %72 = arith.select %65, %70, %71 : vector<2x1xi1>, vector<2x1xf32>
    %c0_31 = arith.constant 0 : index
    %c77 = arith.constant 77 : index
    %73 = vector.load %arg6[%c0_31, %c77] : memref<2x512xf32, #tpu.memory_space<vmem>>, vector<2x256xf32>
    %74 = vector.broadcast %72 : vector<2x1xf32> to vector<2x256xf32>
    %75 = arith.mulf %73, %74 : vector<2x256xf32>
    %76 = arith.addf %67, %75 : vector<2x256xf32>
    %c7 = arith.constant 7 : index
    %77 = memref.load %arg4[%c7] : memref<98xf32, #tpu.memory_space<smem>>
    %c56 = arith.constant 56 : index
    %78 = memref.load %arg4[%c56] : memref<98xf32, #tpu.memory_space<smem>>
    %79 = vector.broadcast %77 : f32 to vector<2x1xf32>
    %80 = vector.broadcast %78 : f32 to vector<2x1xf32>
    %81 = arith.select %65, %79, %80 : vector<2x1xi1>, vector<2x1xf32>
    %c0_32 = arith.constant 0 : index
    %c93 = arith.constant 93 : index
    %82 = vector.load %arg6[%c0_32, %c93] : memref<2x512xf32, #tpu.memory_space<vmem>>, vector<2x256xf32>
    %83 = vector.broadcast %81 : vector<2x1xf32> to vector<2x256xf32>
    %84 = arith.mulf %82, %83 : vector<2x256xf32>
    %85 = arith.addf %76, %84 : vector<2x256xf32>
    %c14 = arith.constant 14 : index
    %86 = memref.load %arg4[%c14] : memref<98xf32, #tpu.memory_space<smem>>
    %c63 = arith.constant 63 : index
    %87 = memref.load %arg4[%c63] : memref<98xf32, #tpu.memory_space<smem>>
    %88 = vector.broadcast %86 : f32 to vector<2x1xf32>
    %89 = vector.broadcast %87 : f32 to vector<2x1xf32>
    %90 = arith.select %65, %88, %89 : vector<2x1xi1>, vector<2x1xf32>
    %c0_33 = arith.constant 0 : index
    %c109 = arith.constant 109 : index
    %91 = vector.load %arg6[%c0_33, %c109] : memref<2x512xf32, #tpu.memory_space<vmem>>, vector<2x256xf32>
    %92 = vector.broadcast %90 : vector<2x1xf32> to vector<2x256xf32>
    %93 = arith.mulf %91, %92 : vector<2x256xf32>
    %94 = arith.addf %85, %93 : vector<2x256xf32>
    %c21 = arith.constant 21 : index
    %95 = memref.load %arg4[%c21] : memref<98xf32, #tpu.memory_space<smem>>
    %c70 = arith.constant 70 : index
    %96 = memref.load %arg4[%c70] : memref<98xf32, #tpu.memory_space<smem>>
    %97 = vector.broadcast %95 : f32 to vector<2x1xf32>
    %98 = vector.broadcast %96 : f32 to vector<2x1xf32>
    %99 = arith.select %65, %97, %98 : vector<2x1xi1>, vector<2x1xf32>
    %c0_34 = arith.constant 0 : index
    %c125 = arith.constant 125 : index
    %100 = vector.load %arg6[%c0_34, %c125] : memref<2x512xf32, #tpu.memory_space<vmem>>, vector<2x256xf32>
    %101 = vector.broadcast %99 : vector<2x1xf32> to vector<2x256xf32>
    %102 = arith.mulf %100, %101 : vector<2x256xf32>
    %103 = arith.addf %94, %102 : vector<2x256xf32>
    %c28 = arith.constant 28 : index
    %104 = memref.load %arg4[%c28] : memref<98xf32, #tpu.memory_space<smem>>
    %c77_35 = arith.constant 77 : index
    %105 = memref.load %arg4[%c77_35] : memref<98xf32, #tpu.memory_space<smem>>
    %106 = vector.broadcast %104 : f32 to vector<2x1xf32>
    %107 = vector.broadcast %105 : f32 to vector<2x1xf32>
    %108 = arith.select %65, %106, %107 : vector<2x1xi1>, vector<2x1xf32>
    %c0_36 = arith.constant 0 : index
    %c141 = arith.constant 141 : index
    %109 = vector.load %arg6[%c0_36, %c141] : memref<2x512xf32, #tpu.memory_space<vmem>>, vector<2x256xf32>
    %110 = vector.broadcast %108 : vector<2x1xf32> to vector<2x256xf32>
    %111 = arith.mulf %109, %110 : vector<2x256xf32>
    %112 = arith.addf %103, %111 : vector<2x256xf32>
    %c35 = arith.constant 35 : index
    %113 = memref.load %arg4[%c35] : memref<98xf32, #tpu.memory_space<smem>>
    %c84 = arith.constant 84 : index
    %114 = memref.load %arg4[%c84] : memref<98xf32, #tpu.memory_space<smem>>
    %115 = vector.broadcast %113 : f32 to vector<2x1xf32>
    %116 = vector.broadcast %114 : f32 to vector<2x1xf32>
    %117 = arith.select %65, %115, %116 : vector<2x1xi1>, vector<2x1xf32>
    %c0_37 = arith.constant 0 : index
    %c157 = arith.constant 157 : index
    %118 = vector.load %arg6[%c0_37, %c157] : memref<2x512xf32, #tpu.memory_space<vmem>>, vector<2x256xf32>
    %119 = vector.broadcast %117 : vector<2x1xf32> to vector<2x256xf32>
    %120 = arith.mulf %118, %119 : vector<2x256xf32>
    %121 = arith.addf %112, %120 : vector<2x256xf32>
    %c42 = arith.constant 42 : index
    %122 = memref.load %arg4[%c42] : memref<98xf32, #tpu.memory_space<smem>>
    %c91 = arith.constant 91 : index
    %123 = memref.load %arg4[%c91] : memref<98xf32, #tpu.memory_space<smem>>
    %124 = vector.broadcast %122 : f32 to vector<2x1xf32>
    %125 = vector.broadcast %123 : f32 to vector<2x1xf32>
    %126 = arith.select %65, %124, %125 : vector<2x1xi1>, vector<2x1xf32>
    %c0_38 = arith.constant 0 : index
    %c173 = arith.constant 173 : index
    %127 = vector.load %arg6[%c0_38, %c173] : memref<2x512xf32, #tpu.memory_space<vmem>>, vector<2x256xf32>
    %128 = vector.broadcast %126 : vector<2x1xf32> to vector<2x256xf32>
    %129 = arith.mulf %127, %128 : vector<2x256xf32>
    %130 = arith.addf %121, %129 : vector<2x256xf32>
    %cst_39 = arith.constant 0.000000e+00 : f32
    %131 = vector.shape_cast %52 : vector<1x256xi1> to vector<1x256xi1>
    %132 = vector.broadcast %131 : vector<1x256xi1> to vector<2x256xi1>
    %133 = vector.broadcast %cst_39 : f32 to vector<2x256xf32>
    %134 = arith.select %132, %130, %133 : vector<2x256xi1>, vector<2x256xf32>
    %135 = arith.addf %66, %134 : vector<2x256xf32>
    %cst_40 = arith.constant 0.000000e+00 : f32
    %136 = vector.broadcast %cst_40 : f32 to vector<2x256xf32>
    %c1_41 = arith.constant 1 : index
    %137 = memref.load %arg4[%c1_41] : memref<98xf32, #tpu.memory_space<smem>>
    %c50 = arith.constant 50 : index
    %138 = memref.load %arg4[%c50] : memref<98xf32, #tpu.memory_space<smem>>
    %139 = vector.broadcast %137 : f32 to vector<2x1xf32>
    %140 = vector.broadcast %138 : f32 to vector<2x1xf32>
    %141 = arith.select %65, %139, %140 : vector<2x1xi1>, vector<2x1xf32>
    %c0_42 = arith.constant 0 : index
    %c78 = arith.constant 78 : index
    %142 = vector.load %arg6[%c0_42, %c78] : memref<2x512xf32, #tpu.memory_space<vmem>>, vector<2x256xf32>
    %143 = vector.broadcast %141 : vector<2x1xf32> to vector<2x256xf32>
    %144 = arith.mulf %142, %143 : vector<2x256xf32>
    %145 = arith.addf %136, %144 : vector<2x256xf32>
    %c8 = arith.constant 8 : index
    %146 = memref.load %arg4[%c8] : memref<98xf32, #tpu.memory_space<smem>>
    %c57 = arith.constant 57 : index
    %147 = memref.load %arg4[%c57] : memref<98xf32, #tpu.memory_space<smem>>
    %148 = vector.broadcast %146 : f32 to vector<2x1xf32>
    %149 = vector.broadcast %147 : f32 to vector<2x1xf32>
    %150 = arith.select %65, %148, %149 : vector<2x1xi1>, vector<2x1xf32>
    %c0_43 = arith.constant 0 : index
    %c94 = arith.constant 94 : index
    %151 = vector.load %arg6[%c0_43, %c94] : memref<2x512xf32, #tpu.memory_space<vmem>>, vector<2x256xf32>
    %152 = vector.broadcast %150 : vector<2x1xf32> to vector<2x256xf32>
    %153 = arith.mulf %151, %152 : vector<2x256xf32>
    %154 = arith.addf %145, %153 : vector<2x256xf32>
    %c15 = arith.constant 15 : index
    %155 = memref.load %arg4[%c15] : memref<98xf32, #tpu.memory_space<smem>>
    %c64 = arith.constant 64 : index
    %156 = memref.load %arg4[%c64] : memref<98xf32, #tpu.memory_space<smem>>
    %157 = vector.broadcast %155 : f32 to vector<2x1xf32>
    %158 = vector.broadcast %156 : f32 to vector<2x1xf32>
    %159 = arith.select %65, %157, %158 : vector<2x1xi1>, vector<2x1xf32>
    %c0_44 = arith.constant 0 : index
    %c110 = arith.constant 110 : index
    %160 = vector.load %arg6[%c0_44, %c110] : memref<2x512xf32, #tpu.memory_space<vmem>>, vector<2x256xf32>
    %161 = vector.broadcast %159 : vector<2x1xf32> to vector<2x256xf32>
    %162 = arith.mulf %160, %161 : vector<2x256xf32>
    %163 = arith.addf %154, %162 : vector<2x256xf32>
    %c22 = arith.constant 22 : index
    %164 = memref.load %arg4[%c22] : memref<98xf32, #tpu.memory_space<smem>>
    %c71 = arith.constant 71 : index
    %165 = memref.load %arg4[%c71] : memref<98xf32, #tpu.memory_space<smem>>
    %166 = vector.broadcast %164 : f32 to vector<2x1xf32>
    %167 = vector.broadcast %165 : f32 to vector<2x1xf32>
    %168 = arith.select %65, %166, %167 : vector<2x1xi1>, vector<2x1xf32>
    %c0_45 = arith.constant 0 : index
    %c126 = arith.constant 126 : index
    %169 = vector.load %arg6[%c0_45, %c126] : memref<2x512xf32, #tpu.memory_space<vmem>>, vector<2x256xf32>
    %170 = vector.broadcast %168 : vector<2x1xf32> to vector<2x256xf32>
    %171 = arith.mulf %169, %170 : vector<2x256xf32>
    %172 = arith.addf %163, %171 : vector<2x256xf32>
    %c29 = arith.constant 29 : index
    %173 = memref.load %arg4[%c29] : memref<98xf32, #tpu.memory_space<smem>>
    %c78_46 = arith.constant 78 : index
    %174 = memref.load %arg4[%c78_46] : memref<98xf32, #tpu.memory_space<smem>>
    %175 = vector.broadcast %173 : f32 to vector<2x1xf32>
    %176 = vector.broadcast %174 : f32 to vector<2x1xf32>
    %177 = arith.select %65, %175, %176 : vector<2x1xi1>, vector<2x1xf32>
    %c0_47 = arith.constant 0 : index
    %c142 = arith.constant 142 : index
    %178 = vector.load %arg6[%c0_47, %c142] : memref<2x512xf32, #tpu.memory_space<vmem>>, vector<2x256xf32>
    %179 = vector.broadcast %177 : vector<2x1xf32> to vector<2x256xf32>
    %180 = arith.mulf %178, %179 : vector<2x256xf32>
    %181 = arith.addf %172, %180 : vector<2x256xf32>
    %c36 = arith.constant 36 : index
    %182 = memref.load %arg4[%c36] : memref<98xf32, #tpu.memory_space<smem>>
    %c85 = arith.constant 85 : index
    %183 = memref.load %arg4[%c85] : memref<98xf32, #tpu.memory_space<smem>>
    %184 = vector.broadcast %182 : f32 to vector<2x1xf32>
    %185 = vector.broadcast %183 : f32 to vector<2x1xf32>
    %186 = arith.select %65, %184, %185 : vector<2x1xi1>, vector<2x1xf32>
    %c0_48 = arith.constant 0 : index
    %c158 = arith.constant 158 : index
    %187 = vector.load %arg6[%c0_48, %c158] : memref<2x512xf32, #tpu.memory_space<vmem>>, vector<2x256xf32>
    %188 = vector.broadcast %186 : vector<2x1xf32> to vector<2x256xf32>
    %189 = arith.mulf %187, %188 : vector<2x256xf32>
    %190 = arith.addf %181, %189 : vector<2x256xf32>
    %c43 = arith.constant 43 : index
    %191 = memref.load %arg4[%c43] : memref<98xf32, #tpu.memory_space<smem>>
    %c92 = arith.constant 92 : index
    %192 = memref.load %arg4[%c92] : memref<98xf32, #tpu.memory_space<smem>>
    %193 = vector.broadcast %191 : f32 to vector<2x1xf32>
    %194 = vector.broadcast %192 : f32 to vector<2x1xf32>
    %195 = arith.select %65, %193, %194 : vector<2x1xi1>, vector<2x1xf32>
    %c0_49 = arith.constant 0 : index
    %c174 = arith.constant 174 : index
    %196 = vector.load %arg6[%c0_49, %c174] : memref<2x512xf32, #tpu.memory_space<vmem>>, vector<2x256xf32>
    %197 = vector.broadcast %195 : vector<2x1xf32> to vector<2x256xf32>
    %198 = arith.mulf %196, %197 : vector<2x256xf32>
    %199 = arith.addf %190, %198 : vector<2x256xf32>
    %cst_50 = arith.constant 0.000000e+00 : f32
    %200 = vector.shape_cast %54 : vector<1x256xi1> to vector<1x256xi1>
    %201 = vector.broadcast %200 : vector<1x256xi1> to vector<2x256xi1>
    %202 = vector.broadcast %cst_50 : f32 to vector<2x256xf32>
    %203 = arith.select %201, %199, %202 : vector<2x256xi1>, vector<2x256xf32>
    %204 = arith.addf %135, %203 : vector<2x256xf32>
    %cst_51 = arith.constant 0.000000e+00 : f32
    %205 = vector.broadcast %cst_51 : f32 to vector<2x256xf32>
    %c2 = arith.constant 2 : index
    %206 = memref.load %arg4[%c2] : memref<98xf32, #tpu.memory_space<smem>>
    %c51 = arith.constant 51 : index
    %207 = memref.load %arg4[%c51] : memref<98xf32, #tpu.memory_space<smem>>
    %208 = vector.broadcast %206 : f32 to vector<2x1xf32>
    %209 = vector.broadcast %207 : f32 to vector<2x1xf32>
    %210 = arith.select %65, %208, %209 : vector<2x1xi1>, vector<2x1xf32>
    %c0_52 = arith.constant 0 : index
    %c79 = arith.constant 79 : index
    %211 = vector.load %arg6[%c0_52, %c79] : memref<2x512xf32, #tpu.memory_space<vmem>>, vector<2x256xf32>
    %212 = vector.broadcast %210 : vector<2x1xf32> to vector<2x256xf32>
    %213 = arith.mulf %211, %212 : vector<2x256xf32>
    %214 = arith.addf %205, %213 : vector<2x256xf32>
    %c9 = arith.constant 9 : index
    %215 = memref.load %arg4[%c9] : memref<98xf32, #tpu.memory_space<smem>>
    %c58 = arith.constant 58 : index
    %216 = memref.load %arg4[%c58] : memref<98xf32, #tpu.memory_space<smem>>
    %217 = vector.broadcast %215 : f32 to vector<2x1xf32>
    %218 = vector.broadcast %216 : f32 to vector<2x1xf32>
    %219 = arith.select %65, %217, %218 : vector<2x1xi1>, vector<2x1xf32>
    %c0_53 = arith.constant 0 : index
    %c95 = arith.constant 95 : index
    %220 = vector.load %arg6[%c0_53, %c95] : memref<2x512xf32, #tpu.memory_space<vmem>>, vector<2x256xf32>
    %221 = vector.broadcast %219 : vector<2x1xf32> to vector<2x256xf32>
    %222 = arith.mulf %220, %221 : vector<2x256xf32>
    %223 = arith.addf %214, %222 : vector<2x256xf32>
    %c16 = arith.constant 16 : index
    %224 = memref.load %arg4[%c16] : memref<98xf32, #tpu.memory_space<smem>>
    %c65 = arith.constant 65 : index
    %225 = memref.load %arg4[%c65] : memref<98xf32, #tpu.memory_space<smem>>
    %226 = vector.broadcast %224 : f32 to vector<2x1xf32>
    %227 = vector.broadcast %225 : f32 to vector<2x1xf32>
    %228 = arith.select %65, %226, %227 : vector<2x1xi1>, vector<2x1xf32>
    %c0_54 = arith.constant 0 : index
    %c111 = arith.constant 111 : index
    %229 = vector.load %arg6[%c0_54, %c111] : memref<2x512xf32, #tpu.memory_space<vmem>>, vector<2x256xf32>
    %230 = vector.broadcast %228 : vector<2x1xf32> to vector<2x256xf32>
    %231 = arith.mulf %229, %230 : vector<2x256xf32>
    %232 = arith.addf %223, %231 : vector<2x256xf32>
    %c23 = arith.constant 23 : index
    %233 = memref.load %arg4[%c23] : memref<98xf32, #tpu.memory_space<smem>>
    %c72 = arith.constant 72 : index
    %234 = memref.load %arg4[%c72] : memref<98xf32, #tpu.memory_space<smem>>
    %235 = vector.broadcast %233 : f32 to vector<2x1xf32>
    %236 = vector.broadcast %234 : f32 to vector<2x1xf32>
    %237 = arith.select %65, %235, %236 : vector<2x1xi1>, vector<2x1xf32>
    %c0_55 = arith.constant 0 : index
    %c127 = arith.constant 127 : index
    %238 = vector.load %arg6[%c0_55, %c127] : memref<2x512xf32, #tpu.memory_space<vmem>>, vector<2x256xf32>
    %239 = vector.broadcast %237 : vector<2x1xf32> to vector<2x256xf32>
    %240 = arith.mulf %238, %239 : vector<2x256xf32>
    %241 = arith.addf %232, %240 : vector<2x256xf32>
    %c30 = arith.constant 30 : index
    %242 = memref.load %arg4[%c30] : memref<98xf32, #tpu.memory_space<smem>>
    %c79_56 = arith.constant 79 : index
    %243 = memref.load %arg4[%c79_56] : memref<98xf32, #tpu.memory_space<smem>>
    %244 = vector.broadcast %242 : f32 to vector<2x1xf32>
    %245 = vector.broadcast %243 : f32 to vector<2x1xf32>
    %246 = arith.select %65, %244, %245 : vector<2x1xi1>, vector<2x1xf32>
    %c0_57 = arith.constant 0 : index
    %c143 = arith.constant 143 : index
    %247 = vector.load %arg6[%c0_57, %c143] : memref<2x512xf32, #tpu.memory_space<vmem>>, vector<2x256xf32>
    %248 = vector.broadcast %246 : vector<2x1xf32> to vector<2x256xf32>
    %249 = arith.mulf %247, %248 : vector<2x256xf32>
    %250 = arith.addf %241, %249 : vector<2x256xf32>
    %c37 = arith.constant 37 : index
    %251 = memref.load %arg4[%c37] : memref<98xf32, #tpu.memory_space<smem>>
    %c86 = arith.constant 86 : index
    %252 = memref.load %arg4[%c86] : memref<98xf32, #tpu.memory_space<smem>>
    %253 = vector.broadcast %251 : f32 to vector<2x1xf32>
    %254 = vector.broadcast %252 : f32 to vector<2x1xf32>
    %255 = arith.select %65, %253, %254 : vector<2x1xi1>, vector<2x1xf32>
    %c0_58 = arith.constant 0 : index
    %c159 = arith.constant 159 : index
    %256 = vector.load %arg6[%c0_58, %c159] : memref<2x512xf32, #tpu.memory_space<vmem>>, vector<2x256xf32>
    %257 = vector.broadcast %255 : vector<2x1xf32> to vector<2x256xf32>
    %258 = arith.mulf %256, %257 : vector<2x256xf32>
    %259 = arith.addf %250, %258 : vector<2x256xf32>
    %c44 = arith.constant 44 : index
    %260 = memref.load %arg4[%c44] : memref<98xf32, #tpu.memory_space<smem>>
    %c93_59 = arith.constant 93 : index
    %261 = memref.load %arg4[%c93_59] : memref<98xf32, #tpu.memory_space<smem>>
    %262 = vector.broadcast %260 : f32 to vector<2x1xf32>
    %263 = vector.broadcast %261 : f32 to vector<2x1xf32>
    %264 = arith.select %65, %262, %263 : vector<2x1xi1>, vector<2x1xf32>
    %c0_60 = arith.constant 0 : index
    %c175 = arith.constant 175 : index
    %265 = vector.load %arg6[%c0_60, %c175] : memref<2x512xf32, #tpu.memory_space<vmem>>, vector<2x256xf32>
    %266 = vector.broadcast %264 : vector<2x1xf32> to vector<2x256xf32>
    %267 = arith.mulf %265, %266 : vector<2x256xf32>
    %268 = arith.addf %259, %267 : vector<2x256xf32>
    %cst_61 = arith.constant 0.000000e+00 : f32
    %269 = vector.shape_cast %56 : vector<1x256xi1> to vector<1x256xi1>
    %270 = vector.broadcast %269 : vector<1x256xi1> to vector<2x256xi1>
    %271 = vector.broadcast %cst_61 : f32 to vector<2x256xf32>
    %272 = arith.select %270, %268, %271 : vector<2x256xi1>, vector<2x256xf32>
    %273 = arith.addf %204, %272 : vector<2x256xf32>
    %cst_62 = arith.constant 0.000000e+00 : f32
    %274 = vector.broadcast %cst_62 : f32 to vector<2x256xf32>
    %c3 = arith.constant 3 : index
    %275 = memref.load %arg4[%c3] : memref<98xf32, #tpu.memory_space<smem>>
    %c52 = arith.constant 52 : index
    %276 = memref.load %arg4[%c52] : memref<98xf32, #tpu.memory_space<smem>>
    %277 = vector.broadcast %275 : f32 to vector<2x1xf32>
    %278 = vector.broadcast %276 : f32 to vector<2x1xf32>
    %279 = arith.select %65, %277, %278 : vector<2x1xi1>, vector<2x1xf32>
    %c0_63 = arith.constant 0 : index
    %c80 = arith.constant 80 : index
    %280 = vector.load %arg6[%c0_63, %c80] : memref<2x512xf32, #tpu.memory_space<vmem>>, vector<2x256xf32>
    %281 = vector.broadcast %279 : vector<2x1xf32> to vector<2x256xf32>
    %282 = arith.mulf %280, %281 : vector<2x256xf32>
    %283 = arith.addf %274, %282 : vector<2x256xf32>
    %c10 = arith.constant 10 : index
    %284 = memref.load %arg4[%c10] : memref<98xf32, #tpu.memory_space<smem>>
    %c59 = arith.constant 59 : index
    %285 = memref.load %arg4[%c59] : memref<98xf32, #tpu.memory_space<smem>>
    %286 = vector.broadcast %284 : f32 to vector<2x1xf32>
    %287 = vector.broadcast %285 : f32 to vector<2x1xf32>
    %288 = arith.select %65, %286, %287 : vector<2x1xi1>, vector<2x1xf32>
    %c0_64 = arith.constant 0 : index
    %c96 = arith.constant 96 : index
    %289 = vector.load %arg6[%c0_64, %c96] : memref<2x512xf32, #tpu.memory_space<vmem>>, vector<2x256xf32>
    %290 = vector.broadcast %288 : vector<2x1xf32> to vector<2x256xf32>
    %291 = arith.mulf %289, %290 : vector<2x256xf32>
    %292 = arith.addf %283, %291 : vector<2x256xf32>
    %c17 = arith.constant 17 : index
    %293 = memref.load %arg4[%c17] : memref<98xf32, #tpu.memory_space<smem>>
    %c66 = arith.constant 66 : index
    %294 = memref.load %arg4[%c66] : memref<98xf32, #tpu.memory_space<smem>>
    %295 = vector.broadcast %293 : f32 to vector<2x1xf32>
    %296 = vector.broadcast %294 : f32 to vector<2x1xf32>
    %297 = arith.select %65, %295, %296 : vector<2x1xi1>, vector<2x1xf32>
    %c0_65 = arith.constant 0 : index
    %c112 = arith.constant 112 : index
    %298 = vector.load %arg6[%c0_65, %c112] : memref<2x512xf32, #tpu.memory_space<vmem>>, vector<2x256xf32>
    %299 = vector.broadcast %297 : vector<2x1xf32> to vector<2x256xf32>
    %300 = arith.mulf %298, %299 : vector<2x256xf32>
    %301 = arith.addf %292, %300 : vector<2x256xf32>
    %c24 = arith.constant 24 : index
    %302 = memref.load %arg4[%c24] : memref<98xf32, #tpu.memory_space<smem>>
    %c73 = arith.constant 73 : index
    %303 = memref.load %arg4[%c73] : memref<98xf32, #tpu.memory_space<smem>>
    %304 = vector.broadcast %302 : f32 to vector<2x1xf32>
    %305 = vector.broadcast %303 : f32 to vector<2x1xf32>
    %306 = arith.select %65, %304, %305 : vector<2x1xi1>, vector<2x1xf32>
    %c0_66 = arith.constant 0 : index
    %c128_67 = arith.constant 128 : index
    %307 = vector.load %arg6[%c0_66, %c128_67] : memref<2x512xf32, #tpu.memory_space<vmem>>, vector<2x256xf32>
    %308 = vector.broadcast %306 : vector<2x1xf32> to vector<2x256xf32>
    %309 = arith.mulf %307, %308 : vector<2x256xf32>
    %310 = arith.addf %301, %309 : vector<2x256xf32>
    %c31 = arith.constant 31 : index
    %311 = memref.load %arg4[%c31] : memref<98xf32, #tpu.memory_space<smem>>
    %c80_68 = arith.constant 80 : index
    %312 = memref.load %arg4[%c80_68] : memref<98xf32, #tpu.memory_space<smem>>
    %313 = vector.broadcast %311 : f32 to vector<2x1xf32>
    %314 = vector.broadcast %312 : f32 to vector<2x1xf32>
    %315 = arith.select %65, %313, %314 : vector<2x1xi1>, vector<2x1xf32>
    %c0_69 = arith.constant 0 : index
    %c144 = arith.constant 144 : index
    %316 = vector.load %arg6[%c0_69, %c144] : memref<2x512xf32, #tpu.memory_space<vmem>>, vector<2x256xf32>
    %317 = vector.broadcast %315 : vector<2x1xf32> to vector<2x256xf32>
    %318 = arith.mulf %316, %317 : vector<2x256xf32>
    %319 = arith.addf %310, %318 : vector<2x256xf32>
    %c38 = arith.constant 38 : index
    %320 = memref.load %arg4[%c38] : memref<98xf32, #tpu.memory_space<smem>>
    %c87 = arith.constant 87 : index
    %321 = memref.load %arg4[%c87] : memref<98xf32, #tpu.memory_space<smem>>
    %322 = vector.broadcast %320 : f32 to vector<2x1xf32>
    %323 = vector.broadcast %321 : f32 to vector<2x1xf32>
    %324 = arith.select %65, %322, %323 : vector<2x1xi1>, vector<2x1xf32>
    %c0_70 = arith.constant 0 : index
    %c160 = arith.constant 160 : index
    %325 = vector.load %arg6[%c0_70, %c160] : memref<2x512xf32, #tpu.memory_space<vmem>>, vector<2x256xf32>
    %326 = vector.broadcast %324 : vector<2x1xf32> to vector<2x256xf32>
    %327 = arith.mulf %325, %326 : vector<2x256xf32>
    %328 = arith.addf %319, %327 : vector<2x256xf32>
    %c45 = arith.constant 45 : index
    %329 = memref.load %arg4[%c45] : memref<98xf32, #tpu.memory_space<smem>>
    %c94_71 = arith.constant 94 : index
    %330 = memref.load %arg4[%c94_71] : memref<98xf32, #tpu.memory_space<smem>>
    %331 = vector.broadcast %329 : f32 to vector<2x1xf32>
    %332 = vector.broadcast %330 : f32 to vector<2x1xf32>
    %333 = arith.select %65, %331, %332 : vector<2x1xi1>, vector<2x1xf32>
    %c0_72 = arith.constant 0 : index
    %c176 = arith.constant 176 : index
    %334 = vector.load %arg6[%c0_72, %c176] : memref<2x512xf32, #tpu.memory_space<vmem>>, vector<2x256xf32>
    %335 = vector.broadcast %333 : vector<2x1xf32> to vector<2x256xf32>
    %336 = arith.mulf %334, %335 : vector<2x256xf32>
    %337 = arith.addf %328, %336 : vector<2x256xf32>
    %338 = arith.addf %273, %337 : vector<2x256xf32>
    %cst_73 = arith.constant 0.000000e+00 : f32
    %339 = vector.broadcast %cst_73 : f32 to vector<2x256xf32>
    %c4 = arith.constant 4 : index
    %340 = memref.load %arg4[%c4] : memref<98xf32, #tpu.memory_space<smem>>
    %c53 = arith.constant 53 : index
    %341 = memref.load %arg4[%c53] : memref<98xf32, #tpu.memory_space<smem>>
    %342 = vector.broadcast %340 : f32 to vector<2x1xf32>
    %343 = vector.broadcast %341 : f32 to vector<2x1xf32>
    %344 = arith.select %65, %342, %343 : vector<2x1xi1>, vector<2x1xf32>
    %c0_74 = arith.constant 0 : index
    %c81 = arith.constant 81 : index
    %345 = vector.load %arg6[%c0_74, %c81] : memref<2x512xf32, #tpu.memory_space<vmem>>, vector<2x256xf32>
    %346 = vector.broadcast %344 : vector<2x1xf32> to vector<2x256xf32>
    %347 = arith.mulf %345, %346 : vector<2x256xf32>
    %348 = arith.addf %339, %347 : vector<2x256xf32>
    %c11 = arith.constant 11 : index
    %349 = memref.load %arg4[%c11] : memref<98xf32, #tpu.memory_space<smem>>
    %c60 = arith.constant 60 : index
    %350 = memref.load %arg4[%c60] : memref<98xf32, #tpu.memory_space<smem>>
    %351 = vector.broadcast %349 : f32 to vector<2x1xf32>
    %352 = vector.broadcast %350 : f32 to vector<2x1xf32>
    %353 = arith.select %65, %351, %352 : vector<2x1xi1>, vector<2x1xf32>
    %c0_75 = arith.constant 0 : index
    %c97 = arith.constant 97 : index
    %354 = vector.load %arg6[%c0_75, %c97] : memref<2x512xf32, #tpu.memory_space<vmem>>, vector<2x256xf32>
    %355 = vector.broadcast %353 : vector<2x1xf32> to vector<2x256xf32>
    %356 = arith.mulf %354, %355 : vector<2x256xf32>
    %357 = arith.addf %348, %356 : vector<2x256xf32>
    %c18 = arith.constant 18 : index
    %358 = memref.load %arg4[%c18] : memref<98xf32, #tpu.memory_space<smem>>
    %c67 = arith.constant 67 : index
    %359 = memref.load %arg4[%c67] : memref<98xf32, #tpu.memory_space<smem>>
    %360 = vector.broadcast %358 : f32 to vector<2x1xf32>
    %361 = vector.broadcast %359 : f32 to vector<2x1xf32>
    %362 = arith.select %65, %360, %361 : vector<2x1xi1>, vector<2x1xf32>
    %c0_76 = arith.constant 0 : index
    %c113 = arith.constant 113 : index
    %363 = vector.load %arg6[%c0_76, %c113] : memref<2x512xf32, #tpu.memory_space<vmem>>, vector<2x256xf32>
    %364 = vector.broadcast %362 : vector<2x1xf32> to vector<2x256xf32>
    %365 = arith.mulf %363, %364 : vector<2x256xf32>
    %366 = arith.addf %357, %365 : vector<2x256xf32>
    %c25 = arith.constant 25 : index
    %367 = memref.load %arg4[%c25] : memref<98xf32, #tpu.memory_space<smem>>
    %c74 = arith.constant 74 : index
    %368 = memref.load %arg4[%c74] : memref<98xf32, #tpu.memory_space<smem>>
    %369 = vector.broadcast %367 : f32 to vector<2x1xf32>
    %370 = vector.broadcast %368 : f32 to vector<2x1xf32>
    %371 = arith.select %65, %369, %370 : vector<2x1xi1>, vector<2x1xf32>
    %c0_77 = arith.constant 0 : index
    %c129 = arith.constant 129 : index
    %372 = vector.load %arg6[%c0_77, %c129] : memref<2x512xf32, #tpu.memory_space<vmem>>, vector<2x256xf32>
    %373 = vector.broadcast %371 : vector<2x1xf32> to vector<2x256xf32>
    %374 = arith.mulf %372, %373 : vector<2x256xf32>
    %375 = arith.addf %366, %374 : vector<2x256xf32>
    %c32 = arith.constant 32 : index
    %376 = memref.load %arg4[%c32] : memref<98xf32, #tpu.memory_space<smem>>
    %c81_78 = arith.constant 81 : index
    %377 = memref.load %arg4[%c81_78] : memref<98xf32, #tpu.memory_space<smem>>
    %378 = vector.broadcast %376 : f32 to vector<2x1xf32>
    %379 = vector.broadcast %377 : f32 to vector<2x1xf32>
    %380 = arith.select %65, %378, %379 : vector<2x1xi1>, vector<2x1xf32>
    %c0_79 = arith.constant 0 : index
    %c145 = arith.constant 145 : index
    %381 = vector.load %arg6[%c0_79, %c145] : memref<2x512xf32, #tpu.memory_space<vmem>>, vector<2x256xf32>
    %382 = vector.broadcast %380 : vector<2x1xf32> to vector<2x256xf32>
    %383 = arith.mulf %381, %382 : vector<2x256xf32>
    %384 = arith.addf %375, %383 : vector<2x256xf32>
    %c39 = arith.constant 39 : index
    %385 = memref.load %arg4[%c39] : memref<98xf32, #tpu.memory_space<smem>>
    %c88 = arith.constant 88 : index
    %386 = memref.load %arg4[%c88] : memref<98xf32, #tpu.memory_space<smem>>
    %387 = vector.broadcast %385 : f32 to vector<2x1xf32>
    %388 = vector.broadcast %386 : f32 to vector<2x1xf32>
    %389 = arith.select %65, %387, %388 : vector<2x1xi1>, vector<2x1xf32>
    %c0_80 = arith.constant 0 : index
    %c161 = arith.constant 161 : index
    %390 = vector.load %arg6[%c0_80, %c161] : memref<2x512xf32, #tpu.memory_space<vmem>>, vector<2x256xf32>
    %391 = vector.broadcast %389 : vector<2x1xf32> to vector<2x256xf32>
    %392 = arith.mulf %390, %391 : vector<2x256xf32>
    %393 = arith.addf %384, %392 : vector<2x256xf32>
    %c46 = arith.constant 46 : index
    %394 = memref.load %arg4[%c46] : memref<98xf32, #tpu.memory_space<smem>>
    %c95_81 = arith.constant 95 : index
    %395 = memref.load %arg4[%c95_81] : memref<98xf32, #tpu.memory_space<smem>>
    %396 = vector.broadcast %394 : f32 to vector<2x1xf32>
    %397 = vector.broadcast %395 : f32 to vector<2x1xf32>
    %398 = arith.select %65, %396, %397 : vector<2x1xi1>, vector<2x1xf32>
    %c0_82 = arith.constant 0 : index
    %c177 = arith.constant 177 : index
    %399 = vector.load %arg6[%c0_82, %c177] : memref<2x512xf32, #tpu.memory_space<vmem>>, vector<2x256xf32>
    %400 = vector.broadcast %398 : vector<2x1xf32> to vector<2x256xf32>
    %401 = arith.mulf %399, %400 : vector<2x256xf32>
    %402 = arith.addf %393, %401 : vector<2x256xf32>
    %cst_83 = arith.constant 0.000000e+00 : f32
    %403 = vector.shape_cast %58 : vector<1x256xi1> to vector<1x256xi1>
    %404 = vector.broadcast %403 : vector<1x256xi1> to vector<2x256xi1>
    %405 = vector.broadcast %cst_83 : f32 to vector<2x256xf32>
    %406 = arith.select %404, %402, %405 : vector<2x256xi1>, vector<2x256xf32>
    %407 = arith.addf %338, %406 : vector<2x256xf32>
    %cst_84 = arith.constant 0.000000e+00 : f32
    %408 = vector.broadcast %cst_84 : f32 to vector<2x256xf32>
    %c5 = arith.constant 5 : index
    %409 = memref.load %arg4[%c5] : memref<98xf32, #tpu.memory_space<smem>>
    %c54 = arith.constant 54 : index
    %410 = memref.load %arg4[%c54] : memref<98xf32, #tpu.memory_space<smem>>
    %411 = vector.broadcast %409 : f32 to vector<2x1xf32>
    %412 = vector.broadcast %410 : f32 to vector<2x1xf32>
    %413 = arith.select %65, %411, %412 : vector<2x1xi1>, vector<2x1xf32>
    %c0_85 = arith.constant 0 : index
    %c82 = arith.constant 82 : index
    %414 = vector.load %arg6[%c0_85, %c82] : memref<2x512xf32, #tpu.memory_space<vmem>>, vector<2x256xf32>
    %415 = vector.broadcast %413 : vector<2x1xf32> to vector<2x256xf32>
    %416 = arith.mulf %414, %415 : vector<2x256xf32>
    %417 = arith.addf %408, %416 : vector<2x256xf32>
    %c12 = arith.constant 12 : index
    %418 = memref.load %arg4[%c12] : memref<98xf32, #tpu.memory_space<smem>>
    %c61 = arith.constant 61 : index
    %419 = memref.load %arg4[%c61] : memref<98xf32, #tpu.memory_space<smem>>
    %420 = vector.broadcast %418 : f32 to vector<2x1xf32>
    %421 = vector.broadcast %419 : f32 to vector<2x1xf32>
    %422 = arith.select %65, %420, %421 : vector<2x1xi1>, vector<2x1xf32>
    %c0_86 = arith.constant 0 : index
    %c98 = arith.constant 98 : index
    %423 = vector.load %arg6[%c0_86, %c98] : memref<2x512xf32, #tpu.memory_space<vmem>>, vector<2x256xf32>
    %424 = vector.broadcast %422 : vector<2x1xf32> to vector<2x256xf32>
    %425 = arith.mulf %423, %424 : vector<2x256xf32>
    %426 = arith.addf %417, %425 : vector<2x256xf32>
    %c19 = arith.constant 19 : index
    %427 = memref.load %arg4[%c19] : memref<98xf32, #tpu.memory_space<smem>>
    %c68 = arith.constant 68 : index
    %428 = memref.load %arg4[%c68] : memref<98xf32, #tpu.memory_space<smem>>
    %429 = vector.broadcast %427 : f32 to vector<2x1xf32>
    %430 = vector.broadcast %428 : f32 to vector<2x1xf32>
    %431 = arith.select %65, %429, %430 : vector<2x1xi1>, vector<2x1xf32>
    %c0_87 = arith.constant 0 : index
    %c114 = arith.constant 114 : index
    %432 = vector.load %arg6[%c0_87, %c114] : memref<2x512xf32, #tpu.memory_space<vmem>>, vector<2x256xf32>
    %433 = vector.broadcast %431 : vector<2x1xf32> to vector<2x256xf32>
    %434 = arith.mulf %432, %433 : vector<2x256xf32>
    %435 = arith.addf %426, %434 : vector<2x256xf32>
    %c26 = arith.constant 26 : index
    %436 = memref.load %arg4[%c26] : memref<98xf32, #tpu.memory_space<smem>>
    %c75 = arith.constant 75 : index
    %437 = memref.load %arg4[%c75] : memref<98xf32, #tpu.memory_space<smem>>
    %438 = vector.broadcast %436 : f32 to vector<2x1xf32>
    %439 = vector.broadcast %437 : f32 to vector<2x1xf32>
    %440 = arith.select %65, %438, %439 : vector<2x1xi1>, vector<2x1xf32>
    %c0_88 = arith.constant 0 : index
    %c130 = arith.constant 130 : index
    %441 = vector.load %arg6[%c0_88, %c130] : memref<2x512xf32, #tpu.memory_space<vmem>>, vector<2x256xf32>
    %442 = vector.broadcast %440 : vector<2x1xf32> to vector<2x256xf32>
    %443 = arith.mulf %441, %442 : vector<2x256xf32>
    %444 = arith.addf %435, %443 : vector<2x256xf32>
    %c33 = arith.constant 33 : index
    %445 = memref.load %arg4[%c33] : memref<98xf32, #tpu.memory_space<smem>>
    %c82_89 = arith.constant 82 : index
    %446 = memref.load %arg4[%c82_89] : memref<98xf32, #tpu.memory_space<smem>>
    %447 = vector.broadcast %445 : f32 to vector<2x1xf32>
    %448 = vector.broadcast %446 : f32 to vector<2x1xf32>
    %449 = arith.select %65, %447, %448 : vector<2x1xi1>, vector<2x1xf32>
    %c0_90 = arith.constant 0 : index
    %c146 = arith.constant 146 : index
    %450 = vector.load %arg6[%c0_90, %c146] : memref<2x512xf32, #tpu.memory_space<vmem>>, vector<2x256xf32>
    %451 = vector.broadcast %449 : vector<2x1xf32> to vector<2x256xf32>
    %452 = arith.mulf %450, %451 : vector<2x256xf32>
    %453 = arith.addf %444, %452 : vector<2x256xf32>
    %c40 = arith.constant 40 : index
    %454 = memref.load %arg4[%c40] : memref<98xf32, #tpu.memory_space<smem>>
    %c89 = arith.constant 89 : index
    %455 = memref.load %arg4[%c89] : memref<98xf32, #tpu.memory_space<smem>>
    %456 = vector.broadcast %454 : f32 to vector<2x1xf32>
    %457 = vector.broadcast %455 : f32 to vector<2x1xf32>
    %458 = arith.select %65, %456, %457 : vector<2x1xi1>, vector<2x1xf32>
    %c0_91 = arith.constant 0 : index
    %c162 = arith.constant 162 : index
    %459 = vector.load %arg6[%c0_91, %c162] : memref<2x512xf32, #tpu.memory_space<vmem>>, vector<2x256xf32>
    %460 = vector.broadcast %458 : vector<2x1xf32> to vector<2x256xf32>
    %461 = arith.mulf %459, %460 : vector<2x256xf32>
    %462 = arith.addf %453, %461 : vector<2x256xf32>
    %c47 = arith.constant 47 : index
    %463 = memref.load %arg4[%c47] : memref<98xf32, #tpu.memory_space<smem>>
    %c96_92 = arith.constant 96 : index
    %464 = memref.load %arg4[%c96_92] : memref<98xf32, #tpu.memory_space<smem>>
    %465 = vector.broadcast %463 : f32 to vector<2x1xf32>
    %466 = vector.broadcast %464 : f32 to vector<2x1xf32>
    %467 = arith.select %65, %465, %466 : vector<2x1xi1>, vector<2x1xf32>
    %c0_93 = arith.constant 0 : index
    %c178 = arith.constant 178 : index
    %468 = vector.load %arg6[%c0_93, %c178] : memref<2x512xf32, #tpu.memory_space<vmem>>, vector<2x256xf32>
    %469 = vector.broadcast %467 : vector<2x1xf32> to vector<2x256xf32>
    %470 = arith.mulf %468, %469 : vector<2x256xf32>
    %471 = arith.addf %462, %470 : vector<2x256xf32>
    %cst_94 = arith.constant 0.000000e+00 : f32
    %472 = vector.shape_cast %60 : vector<1x256xi1> to vector<1x256xi1>
    %473 = vector.broadcast %472 : vector<1x256xi1> to vector<2x256xi1>
    %474 = vector.broadcast %cst_94 : f32 to vector<2x256xf32>
    %475 = arith.select %473, %471, %474 : vector<2x256xi1>, vector<2x256xf32>
    %476 = arith.addf %407, %475 : vector<2x256xf32>
    %cst_95 = arith.constant 0.000000e+00 : f32
    %477 = vector.broadcast %cst_95 : f32 to vector<2x256xf32>
    %c6 = arith.constant 6 : index
    %478 = memref.load %arg4[%c6] : memref<98xf32, #tpu.memory_space<smem>>
    %c55 = arith.constant 55 : index
    %479 = memref.load %arg4[%c55] : memref<98xf32, #tpu.memory_space<smem>>
    %480 = vector.broadcast %478 : f32 to vector<2x1xf32>
    %481 = vector.broadcast %479 : f32 to vector<2x1xf32>
    %482 = arith.select %65, %480, %481 : vector<2x1xi1>, vector<2x1xf32>
    %c0_96 = arith.constant 0 : index
    %c83 = arith.constant 83 : index
    %483 = vector.load %arg6[%c0_96, %c83] : memref<2x512xf32, #tpu.memory_space<vmem>>, vector<2x256xf32>
    %484 = vector.broadcast %482 : vector<2x1xf32> to vector<2x256xf32>
    %485 = arith.mulf %483, %484 : vector<2x256xf32>
    %486 = arith.addf %477, %485 : vector<2x256xf32>
    %c13 = arith.constant 13 : index
    %487 = memref.load %arg4[%c13] : memref<98xf32, #tpu.memory_space<smem>>
    %c62 = arith.constant 62 : index
    %488 = memref.load %arg4[%c62] : memref<98xf32, #tpu.memory_space<smem>>
    %489 = vector.broadcast %487 : f32 to vector<2x1xf32>
    %490 = vector.broadcast %488 : f32 to vector<2x1xf32>
    %491 = arith.select %65, %489, %490 : vector<2x1xi1>, vector<2x1xf32>
    %c0_97 = arith.constant 0 : index
    %c99 = arith.constant 99 : index
    %492 = vector.load %arg6[%c0_97, %c99] : memref<2x512xf32, #tpu.memory_space<vmem>>, vector<2x256xf32>
    %493 = vector.broadcast %491 : vector<2x1xf32> to vector<2x256xf32>
    %494 = arith.mulf %492, %493 : vector<2x256xf32>
    %495 = arith.addf %486, %494 : vector<2x256xf32>
    %c20 = arith.constant 20 : index
    %496 = memref.load %arg4[%c20] : memref<98xf32, #tpu.memory_space<smem>>
    %c69 = arith.constant 69 : index
    %497 = memref.load %arg4[%c69] : memref<98xf32, #tpu.memory_space<smem>>
    %498 = vector.broadcast %496 : f32 to vector<2x1xf32>
    %499 = vector.broadcast %497 : f32 to vector<2x1xf32>
    %500 = arith.select %65, %498, %499 : vector<2x1xi1>, vector<2x1xf32>
    %c0_98 = arith.constant 0 : index
    %c115 = arith.constant 115 : index
    %501 = vector.load %arg6[%c0_98, %c115] : memref<2x512xf32, #tpu.memory_space<vmem>>, vector<2x256xf32>
    %502 = vector.broadcast %500 : vector<2x1xf32> to vector<2x256xf32>
    %503 = arith.mulf %501, %502 : vector<2x256xf32>
    %504 = arith.addf %495, %503 : vector<2x256xf32>
    %c27 = arith.constant 27 : index
    %505 = memref.load %arg4[%c27] : memref<98xf32, #tpu.memory_space<smem>>
    %c76 = arith.constant 76 : index
    %506 = memref.load %arg4[%c76] : memref<98xf32, #tpu.memory_space<smem>>
    %507 = vector.broadcast %505 : f32 to vector<2x1xf32>
    %508 = vector.broadcast %506 : f32 to vector<2x1xf32>
    %509 = arith.select %65, %507, %508 : vector<2x1xi1>, vector<2x1xf32>
    %c0_99 = arith.constant 0 : index
    %c131 = arith.constant 131 : index
    %510 = vector.load %arg6[%c0_99, %c131] : memref<2x512xf32, #tpu.memory_space<vmem>>, vector<2x256xf32>
    %511 = vector.broadcast %509 : vector<2x1xf32> to vector<2x256xf32>
    %512 = arith.mulf %510, %511 : vector<2x256xf32>
    %513 = arith.addf %504, %512 : vector<2x256xf32>
    %c34 = arith.constant 34 : index
    %514 = memref.load %arg4[%c34] : memref<98xf32, #tpu.memory_space<smem>>
    %c83_100 = arith.constant 83 : index
    %515 = memref.load %arg4[%c83_100] : memref<98xf32, #tpu.memory_space<smem>>
    %516 = vector.broadcast %514 : f32 to vector<2x1xf32>
    %517 = vector.broadcast %515 : f32 to vector<2x1xf32>
    %518 = arith.select %65, %516, %517 : vector<2x1xi1>, vector<2x1xf32>
    %c0_101 = arith.constant 0 : index
    %c147 = arith.constant 147 : index
    %519 = vector.load %arg6[%c0_101, %c147] : memref<2x512xf32, #tpu.memory_space<vmem>>, vector<2x256xf32>
    %520 = vector.broadcast %518 : vector<2x1xf32> to vector<2x256xf32>
    %521 = arith.mulf %519, %520 : vector<2x256xf32>
    %522 = arith.addf %513, %521 : vector<2x256xf32>
    %c41 = arith.constant 41 : index
    %523 = memref.load %arg4[%c41] : memref<98xf32, #tpu.memory_space<smem>>
    %c90 = arith.constant 90 : index
    %524 = memref.load %arg4[%c90] : memref<98xf32, #tpu.memory_space<smem>>
    %525 = vector.broadcast %523 : f32 to vector<2x1xf32>
    %526 = vector.broadcast %524 : f32 to vector<2x1xf32>
    %527 = arith.select %65, %525, %526 : vector<2x1xi1>, vector<2x1xf32>
    %c0_102 = arith.constant 0 : index
    %c163 = arith.constant 163 : index
    %528 = vector.load %arg6[%c0_102, %c163] : memref<2x512xf32, #tpu.memory_space<vmem>>, vector<2x256xf32>
    %529 = vector.broadcast %527 : vector<2x1xf32> to vector<2x256xf32>
    %530 = arith.mulf %528, %529 : vector<2x256xf32>
    %531 = arith.addf %522, %530 : vector<2x256xf32>
    %c48 = arith.constant 48 : index
    %532 = memref.load %arg4[%c48] : memref<98xf32, #tpu.memory_space<smem>>
    %c97_103 = arith.constant 97 : index
    %533 = memref.load %arg4[%c97_103] : memref<98xf32, #tpu.memory_space<smem>>
    %534 = vector.broadcast %532 : f32 to vector<2x1xf32>
    %535 = vector.broadcast %533 : f32 to vector<2x1xf32>
    %536 = arith.select %65, %534, %535 : vector<2x1xi1>, vector<2x1xf32>
    %c0_104 = arith.constant 0 : index
    %c179 = arith.constant 179 : index
    %537 = vector.load %arg6[%c0_104, %c179] : memref<2x512xf32, #tpu.memory_space<vmem>>, vector<2x256xf32>
    %538 = vector.broadcast %536 : vector<2x1xf32> to vector<2x256xf32>
    %539 = arith.mulf %537, %538 : vector<2x256xf32>
    %540 = arith.addf %531, %539 : vector<2x256xf32>
    %cst_105 = arith.constant 0.000000e+00 : f32
    %541 = vector.shape_cast %62 : vector<1x256xi1> to vector<1x256xi1>
    %542 = vector.broadcast %541 : vector<1x256xi1> to vector<2x256xi1>
    %543 = vector.broadcast %cst_105 : f32 to vector<2x256xf32>
    %544 = arith.select %542, %540, %543 : vector<2x256xi1>, vector<2x256xf32>
    %545 = arith.addf %476, %544 : vector<2x256xf32>
    %546 = vector.extract_strided_slice %545 {offsets = [0, 0], sizes = [1, 256], strides = [1, 1]} : vector<2x256xf32> to vector<1x256xf32>
    %547 = vector.extract_strided_slice %545 {offsets = [1, 0], sizes = [1, 256], strides = [1, 1]} : vector<2x256xf32> to vector<1x256xf32>
    %548 = arith.addf %546, %547 : vector<1x256xf32>
    %cst_106 = arith.constant 5.000000e-01 : f32
    %549 = vector.broadcast %cst_106 : f32 to vector<1x256xf32>
    %550 = arith.mulf %549, %548 : vector<1x256xf32>
    %551 = math.tanh %550 : vector<1x256xf32>
    %cst_107 = arith.constant 1.000000e+00 : f32
    %552 = vector.broadcast %cst_107 : f32 to vector<1x256xf32>
    %553 = arith.addf %551, %552 : vector<1x256xf32>
    %cst_108 = arith.constant 5.000000e-01 : f32
    %554 = vector.broadcast %cst_108 : f32 to vector<1x256xf32>
    %555 = arith.mulf %554, %553 : vector<1x256xf32>
    %c0_109 = arith.constant 0 : index
    %c0_110 = arith.constant 0 : index
    %c0_111 = arith.constant 0 : index
    %556 = vector.load %arg1[%c0_109, %c0_110, %c0_111] : memref<1x32x256xf32, #tpu.memory_space<vmem>>, vector<1x32x256xf32>
    %557 = vector.shape_cast %556 : vector<1x32x256xf32> to vector<32x256xf32>
    %558 = vector.broadcast %37 : vector<32x1xf32> to vector<32x256xf32>
    %559 = arith.mulf %557, %558 : vector<32x256xf32>
    %560 = vector.broadcast %555 : vector<1x256xf32> to vector<32x256xf32>
    %561 = arith.mulf %559, %560 : vector<32x256xf32>
    %c0_112 = arith.constant 0 : index
    %c0_113 = arith.constant 0 : index
    %c0_114 = arith.constant 0 : index
    %562 = vector.load %arg5[%c0_112, %c0_113, %c0_114] : memref<1x32x256xf32, #tpu.memory_space<vmem>>, vector<1x32x256xf32>
    %563 = vector.shape_cast %562 : vector<1x32x256xf32> to vector<32x256xf32>
    %564 = vector.shape_cast %561 : vector<32x256xf32> to vector<1x32x256xf32>
    tpu.vector_store %arg5[%c0_112, %c0_113, %c0_114], %564 {strides = array<i32>} : memref<1x32x256xf32, #tpu.memory_space<vmem>>, vector<1x32x256xf32>,
    return
  }
  func.func @transform_0(%arg0: i32) -> (i32, i32, i32) {
    %c0_i32 = arith.constant 0 : i32
    %c0_i32_0 = arith.constant 0 : i32
    %c0_i32_1 = arith.constant 0 : i32
    return %arg0, %c0_i32, %c0_i32_0 : i32, i32, i32
  }
  func.func @transform_1(%arg0: i32) -> (i32, i32) {
    %c0_i32 = arith.constant 0 : i32
    %c0_i32_0 = arith.constant 0 : i32
    %c0_i32_1 = arith.constant 0 : i32
    return %c0_i32, %c0_i32_0 : i32, i32
  }
  func.func @transform_2(%arg0: i32) -> (i32, i32) {
    %c0_i32 = arith.constant 0 : i32
    %c0_i32_0 = arith.constant 0 : i32
    %c0_i32_1 = arith.constant 0 : i32
    return %c0_i32, %c0_i32_0 : i32, i32
  }
  func.func @transform_3(%arg0: i32) -> i32 {
    %c0_i32 = arith.constant 0 : i32
    %c0_i32_0 = arith.constant 0 : i32
    return %c0_i32 : i32
  }
  func.func @transform_4(%arg0: i32) -> (i32, i32, i32) {
    %c0_i32 = arith.constant 0 : i32
    %c0_i32_0 = arith.constant 0 : i32
    %c0_i32_1 = arith.constant 0 : i32
    return %arg0, %c0_i32, %c0_i32_0 : i32, i32, i32
  }
}

</mosaic_0001>

<llo_original>
// kernel: tpu_custom_call.1
$region0: #{tpu_custom_call.1}
  #allocation0 [shape = 'u32[]', space=smem, size = 0x4, offset = 0x4, fixed_abs, tag = 'smem constant byte address 0x4 - core index']
  #allocation1 [shape = 'u32[144,128]{1,0:T(1,128)}', space=vmem, size = 0x12000, scoped, tag = 'internal scratch']
  #allocation2 [shape = 'f32[2,512]{1,0:T(2,128)}', space=vmem, size = 0x1000, scoped, tag = 'scratch operand']
  %s0 = inlined_call_operand.hbm [shape: f32[2,32,256], index: 0, kind: input, shape index: {}]
  %s1 = inlined_call_operand.vmem [shape: f32[32,2], index: 1, kind: input, shape index: {}]
  %s2 = inlined_call_operand.vmem [shape: f32[32,2], index: 2, kind: input, shape index: {}]
  %s3 = inlined_call_operand.vmem [shape: f32[98], index: 3, kind: input, shape index: {}]
  %s4 = inlined_call_operand.hbm [shape: f32[2,32,256], index: 4, kind: output, shape index: {}]
  %s5 = sld [smem:[#allocation0]]
  $region57: #{tpu_custom_call.1} parent=0
    _
  %s7 = ssub.s32 1, %s5
  %s8 = scalar_select 0, %s7, %s5
  $region1: #{tpu_custom_call.1} parent=0
    #allocation3 [shape = 'u8[65536]{0}', space=vmem, size = 0x10000, scoped, tag = 'input window, operand 0']
    #allocation4 [shape = 's32[2]{0}', space=sflag, size = 0x8, scoped, tag = 'scoped memory for tpu_custom_call.1']
    #allocation5 [shape = 's32[2]{0}', space=sflag, size = 0x8, scoped, tag = 'scoped memory for tpu_custom_call.1']
    #allocation6 [shape = 's32[2]{0}', space=sflag, size = 0x8, scoped, tag = 'scoped memory for tpu_custom_call.1']
    #allocation7 [shape = 'u8[512]{0}', space=smem, size = 0x200, scoped, tag = 'input window, operand 3, single buffered']
    #allocation8 [shape = 'u8[65536]{0}', space=vmem, size = 0x10000, scoped, tag = 'output window, operand 0']
    %9 = vsyncpa [#allocation4], 0
    %s10 = scalar_lea.sflag [#allocation4], 1
    %11 = vsyncpa %s10, 0
    %12 = vsyncpa [#allocation6], 0
    %13 = vsyncpa [#allocation5], 0
    %s14 = scalar_lea.sflag [#allocation5], 1
    %15 = vsyncpa %s14, 0
    loop: start=0, step=1, limit=4
    $region2: #{tpu_custom_call.1} parent=1 // loop_pre_header
      _
    $region3: #{tpu_custom_call.1} parent=1 // loop_header
      %s17 = sphi 0, %s21
      %p18 = scmp.ge.s32.totalorder %s17, 4
      %s27 = sphi 0, %s29
      %s30 = sphi 0, %s27
      %s31 = sphi 0, %s30
      %s47 = sphi 0, %s31
      %s51 = sphi 0, %s51
      %s53 = sphi 0, %s51
      %s54 = sphi 0, %s53
      %s68 = sphi 0, %s54
      %s72 = sphi 0, %s72
      %s74 = sphi 0, %s72
      %s75 = sphi 0, %s74
      %s89 = sphi 0, %s75
      %s93 = sphi 0, %s93
      %s95 = sphi 0, %s93
      %s96 = sphi 0, %s95
      %s110 = sphi 0, %s96
      %s116 = sphi 0, %s118
      %s119 = sphi 0, %s116
      %s120 = sphi 0, %s119
      %s136 = sphi 0, %s120
    $region4: #{tpu_custom_call.1} parent=1 // loop_header_branch
      %20 = sbr.rel (%p18) target = $region8
    $region5: #{tpu_custom_call.1} parent=1 // loop_body
      %s22 = ssub.s32 %s17, 1
      %s23 = ssub.s32 %s17, 2
      %s24 = sadd.s32 %s17, 1
      %s25 = ssub.s32 %s17, %s24
      %p26 = scmp.eq.s32.totalorder %s25, 0
      %s28 = sadd.s32 %s27, 1
      %s29 = scalar_select %p26, %s27, %s28
      %p32 = pneg %p26
      %p33 = scmp.eq.s32.totalorder %s17, 1
      %p34 = por %p32, %p33
      %p35 = scmp.ne.s32.totalorder %s27, %s30
      %p36 = scmp.eq.s32.totalorder %s17, 0
      %p37 = por %p35, %p36
      %p38 = scmp.ne.s32.totalorder %s27, %s30
      %p39 = scmp.eq.s32.totalorder %s22, 1
      %p40 = por %p38, %p39
      %p41 = scmp.ne.s32.totalorder %s30, %s31
      %p42 = scmp.eq.s32.totalorder %s22, 0
      %p43 = por %p41, %p42
      %p44 = scmp.ne.s32.totalorder %s30, %s31
      %p45 = scmp.eq.s32.totalorder %s23, 1
      %p46 = por %p44, %p45
      %p48 = scmp.ne.s32.totalorder %s31, %s47
      %p49 = scmp.eq.s32.totalorder %s23, 0
      %p50 = por %p48, %p49
      %s52 = sadd.s32 %s51, 1
      %p55 = scmp.eq.s32.totalorder %s17, 1
      %p56 = scmp.ne.s32.totalorder %s51, %s53
      %p57 = scmp.eq.s32.totalorder %s17, 0
      %p58 = por %p56, %p57
      %p59 = scmp.ne.s32.totalorder %s51, %s53
      %p60 = scmp.eq.s32.totalorder %s22, 1
      %p61 = por %p59, %p60
      %p62 = scmp.ne.s32.totalorder %s53, %s54
      %p63 = scmp.eq.s32.totalorder %s22, 0
      %p64 = por %p62, %p63
      %p65 = scmp.ne.s32.totalorder %s53, %s54
      %p66 = scmp.eq.s32.totalorder %s23, 1
      %p67 = por %p65, %p66
      %p69 = scmp.ne.s32.totalorder %s54, %s68
      %p70 = scmp.eq.s32.totalorder %s23, 0
      %p71 = por %p69, %p70
      %s73 = sadd.s32 %s72, 1
      %p76 = scmp.eq.s32.totalorder %s17, 1
      %p77 = scmp.ne.s32.totalorder %s72, %s74
      %p78 = scmp.eq.s32.totalorder %s17, 0
      %p79 = por %p77, %p78
      %p80 = scmp.ne.s32.totalorder %s72, %s74
      %p81 = scmp.eq.s32.totalorder %s22, 1
      %p82 = por %p80, %p81
      %p83 = scmp.ne.s32.totalorder %s74, %s75
      %p84 = scmp.eq.s32.totalorder %s22, 0
      %p85 = por %p83, %p84
      %p86 = scmp.ne.s32.totalorder %s74, %s75
      %p87 = scmp.eq.s32.totalorder %s23, 1
      %p88 = por %p86, %p87
      %p90 = scmp.ne.s32.totalorder %s75, %s89
      %p91 = scmp.eq.s32.totalorder %s23, 0
      %p92 = por %p90, %p91
      %s94 = sadd.s32 %s93, 1
      %p97 = scmp.eq.s32.totalorder %s17, 1
      %p98 = scmp.ne.s32.totalorder %s93, %s95
      %p99 = scmp.eq.s32.totalorder %s17, 0
      %p100 = por %p98, %p99
      %p101 = scmp.ne.s32.totalorder %s93, %s95
      %p102 = scmp.eq.s32.totalorder %s22, 1
      %p103 = por %p101, %p102
      %p104 = scmp.ne.s32.totalorder %s95, %s96
      %p105 = scmp.eq.s32.totalorder %s22, 0
      %p106 = por %p104, %p105
      %p107 = scmp.ne.s32.totalorder %s95, %s96
      %p108 = scmp.eq.s32.totalorder %s23, 1
      %p109 = por %p107, %p108
      %p111 = scmp.ne.s32.totalorder %s96, %s110
      %p112 = scmp.eq.s32.totalorder %s23, 0
      %p113 = por %p111, %p112
      %s114 = ssub.s32 %s17, %s24
      %p115 = scmp.eq.s32.totalorder %s114, 0
      %s117 = sadd.s32 %s116, 1
      %s118 = scalar_select %p115, %s116, %s117
      %p121 = pneg %p115
      %p122 = scmp.eq.s32.totalorder %s17, 1
      %p123 = por %p121, %p122
      %p124 = scmp.ne.s32.totalorder %s116, %s119
      %p125 = scmp.eq.s32.totalorder %s17, 0
      %p126 = por %p124, %p125
      %p127 = scmp.ne.s32.totalorder %s116, %s119
      %p128 = scmp.eq.s32.totalorder %s22, 1
      %p129 = por %p127, %p128
      %p130 = scmp.ne.s32.totalorder %s119, %s120
      %p131 = scmp.eq.s32.totalorder %s22, 0
      %p132 = por %p130, %p131
      %p133 = scmp.ne.s32.totalorder %s119, %s120
      %p134 = scmp.eq.s32.totalorder %s23, 1
      %p135 = por %p133, %p134
      %p137 = scmp.ne.s32.totalorder %s120, %s136
      %p138 = scmp.eq.s32.totalorder %s23, 0
      %p139 = por %p137, %p138
      %p140 = scmp.le.s32.totalorder 1, %s17
      %p141 = scmp.lt.s32.totalorder %s17, 3
      %p142 = pnand %p140, %p141
      %p143 = pneg %p142
      // Predicated region
      $region9: #{tpu_custom_call.1} parent=5 // pred_check
        _
      $region10: #{tpu_custom_call.1} parent=5 // pred_check_branch
        %145 = sbr.rel (%p142) target = $region12
      $region11: #{tpu_custom_call.1} parent=5 // pred_region
        %s146 = ssub.s32 %s17, 1
        // Predicated region
        $region13: #{tpu_custom_call.1} parent=11 // pred_check
          %p147 = pneg %p64
        $region14: #{tpu_custom_call.1} parent=11 // pred_check_branch
          %149 = sbr.rel (%p147) target = $region16
        $region15: #{tpu_custom_call.1} parent=11 // pred_region
          _
        $region16: #{tpu_custom_call.1} parent=11 // pred_fallthru
          _
        // Predicated region
        $region17: #{tpu_custom_call.1} parent=11 // pred_check
          %p150 = pneg %p85
        $region18: #{tpu_custom_call.1} parent=11 // pred_check_branch
          %152 = sbr.rel (%p150) target = $region20
        $region19: #{tpu_custom_call.1} parent=11 // pred_region
          _
        $region20: #{tpu_custom_call.1} parent=11 // pred_fallthru
          _
        // Predicated region
        $region21: #{tpu_custom_call.1} parent=11 // pred_check
          %p153 = pneg %p106
        $region22: #{tpu_custom_call.1} parent=11 // pred_check_branch
          %155 = sbr.rel (%p153) target = $region24
        $region23: #{tpu_custom_call.1} parent=11 // pred_region
          %s157 = ssub.s32 16, 16
          %158 = vsyncadd [#allocation6], %s157
          %s160 = sshll.u32 %s3, 4
          %s161 = int_to_ptr.vmem [resolvable:$true] %s160
          %163 = dma.vmem_to_smem %s161, 16, [#allocation7], [#allocation6]
        $region24: #{tpu_custom_call.1} parent=11 // pred_fallthru
          _
      $region12: #{tpu_custom_call.1} parent=5 // pred_fallthru
        _
      %p164 = scmp.lt.s32.totalorder %s17, 2
      // Predicated region
      $region25: #{tpu_custom_call.1} parent=5 // pred_check
        %p165 = pneg %p164
      $region26: #{tpu_custom_call.1} parent=5 // pred_check_branch
        %167 = sbr.rel (%p165) target = $region28
      $region27: #{tpu_custom_call.1} parent=5 // pred_region
        // Predicated region
        $region29: #{tpu_custom_call.1} parent=27 // pred_check
          %p168 = pneg %p37
        $region30: #{tpu_custom_call.1} parent=27 // pred_check_branch
          %170 = sbr.rel (%p168) target = $region32
        $region31: #{tpu_custom_call.1} parent=27 // pred_region
          %s171 = sand.u32 %s27, 1
          %s172 = scalar_lea.sflag [#allocation4], %s171
          %s173 = sand.u32 %s27, 1
          %s174 = smul.addr %s173, 64
          %s175 = scalar_lea.vmem [#allocation3], %s174
          %s177 = ssub.s32 1024, 1024
          %178 = vsyncadd %s172, %s177
          %s179 = smul.addr %s17, 8
          %s180 = smul.addr %s179, 128
          %s181 = scalar_lea.hbm %s0, %s180
          %s182 = sshll.u32 %s175, 4
          %s183 = int_to_ptr.vmem [resolvable:$true] %s182
          %188 = dma.hbm_to_vmem [thread:$0]  %s181, 1024, %s183, %s172, 256, 256, 16
        $region32: #{tpu_custom_call.1} parent=27 // pred_fallthru
          _
      $region28: #{tpu_custom_call.1} parent=5 // pred_fallthru
        _
      %p189 = scmp.le.s32.totalorder 1, %s17
      %p190 = scmp.lt.s32.totalorder %s17, 3
      %p191 = pnand %p189, %p190
      %p192 = pneg %p191
      // Predicated region
      $region33: #{tpu_custom_call.1} parent=5 // pred_check
        _
      $region34: #{tpu_custom_call.1} parent=5 // pred_check_branch
        %194 = sbr.rel (%p191) target = $region36
      $region35: #{tpu_custom_call.1} parent=5 // pred_region
        %s195 = ssub.s32 %s17, 1
        %s196 = sand.u32 %s30, 1
        %s197 = scalar_lea.sflag [#allocation4], %s196
        %s198 = sand.u32 %s30, 1
        %s199 = smul.addr %s198, 64
        %s200 = scalar_lea.vmem [#allocation3], %s199
        // Predicated region
        $region37: #{tpu_custom_call.1} parent=35 // pred_check
          %p201 = pneg %p43
        $region38: #{tpu_custom_call.1} parent=35 // pred_check_branch
          %203 = sbr.rel (%p201) target = $region40
        $region39: #{tpu_custom_call.1} parent=35 // pred_region
          %204 = dma.done %s197, 1024
        $region40: #{tpu_custom_call.1} parent=35 // pred_fallthru
          _
        // Predicated region
        $region41: #{tpu_custom_call.1} parent=35 // pred_check
          %p205 = pneg %p106
        $region42: #{tpu_custom_call.1} parent=35 // pred_check_branch
          %207 = sbr.rel (%p205) target = $region44
        $region43: #{tpu_custom_call.1} parent=35 // pred_region
          %208 = dma.done [#allocation6], 16
        $region44: #{tpu_custom_call.1} parent=35 // pred_fallthru
          _
        %209 = sfence
        %s210 = sand.u32 %s30, 1
        %s211 = scalar_lea.sflag [#allocation4], %s210
        %s212 = sand.u32 %s30, 1
        %s213 = smul.addr %s212, 64
        %s214 = scalar_lea.vmem [#allocation3], %s213
        %p215 = pneg %p43
        %p216 = pneg %p40
        %p217 = pneg %p64
        %p218 = pneg %p61
        %p219 = pneg %p85
        %p220 = pneg %p82
        %p221 = pneg %p106
        %p222 = pneg %p103
        %p223 = pneg %p132
        %p224 = pneg %p129
        %s225 = sand.u32 %s119, 1
        %s226 = scalar_lea.sflag [#allocation5], %s225
        %s227 = sand.u32 %s119, 1
        %s228 = smul.addr %s227, 64
        %s229 = scalar_lea.vmem [#allocation8], %s228
        %v230 = vld [vmem:[%s1] sm:$0xff]
        %v231 = vld [vmem:[%s1 + $0x8] sm:$0xff]
        %v232 = vld [vmem:[%s1 + $0x10] sm:$0xff]
        %v233 = vld [vmem:[%s1 + $0x18] sm:$0xff]
        %v234 = vld [vmem:[%s2] sm:$0xff]
        %v235 = vld [vmem:[%s2 + $0x8] sm:$0xff]
        %v236 = vld [vmem:[%s2 + $0x10] sm:$0xff]
        %v237 = vld [vmem:[%s2 + $0x18] sm:$0xff]
        %238 = vst [vmem:[#allocation2] sm:$0x3] 0.0
        %239 = vst [vmem:[#allocation2 + $0x6] sm:$0x3] 0.0
        %v240 = vld [vmem:[%s200] sm:$0xff]
        %v241 = vld [vmem:[%s200 + $0x8] sm:$0xff]
        %v242 = vld [vmem:[%s200 + $0x10] sm:$0xff]
        %v243 = vld [vmem:[%s200 + $0x18] sm:$0xff]
        %v244 = vld [vmem:[%s200 + $0x20] sm:$0xff]
        %v245 = vld [vmem:[%s200 + $0x28] sm:$0xff]
        %v246 = vld [vmem:[%s200 + $0x30] sm:$0xff]
        %v247 = vld [vmem:[%s200 + $0x38] sm:$0xff]
        %v248 = vmax.f32 %v240, %v241
        %249 = vmax.xlane.f32.xlu0 %v248
        %v250 = vpop.xlane.xlu0 %249
        %v251 = vmax.f32 %v242, %v243
        %252 = vmax.xlane.f32.xlu0 %v251
        %v253 = vpop.xlane.xlu0 %252
        %v254 = vmax.f32 %v244, %v245
        %255 = vmax.xlane.f32.xlu0 %v254
        %v256 = vpop.xlane.xlu0 %255
        %v257 = vmax.f32 %v246, %v247
        %258 = vmax.xlane.f32.xlu0 %v257
        %v259 = vpop.xlane.xlu0 %258
        %v260 = vadd.f32 %v240, %v241
        %261 = vadd.xlane.f32.xlu0 %v260
        %v262 = vpop.xlane.xlu0 %261
        %v263 = vadd.f32 %v242, %v243
        %264 = vadd.xlane.f32.xlu0 %v263
        %v265 = vpop.xlane.xlu0 %264
        %v266 = vadd.f32 %v244, %v245
        %267 = vadd.xlane.f32.xlu0 %v266
        %v268 = vpop.xlane.xlu0 %267
        %v269 = vadd.f32 %v246, %v247
        %270 = vadd.xlane.f32.xlu0 %v269
        %v271 = vpop.xlane.xlu0 %270
        %v272 = vrcp.pop 256.0
        %v273 = vmul.f32 %v262, %v272
        %v274 = vmul.f32 %v265, %v272
        %v275 = vmul.f32 %v268, %v272
        %v276 = vmul.f32 %v271, %v272
        %v277 = vmul.f32 %v230, %v250
        %v278 = vmul.f32 %v231, %v253
        %v279 = vmul.f32 %v232, %v256
        %v280 = vmul.f32 %v233, %v259
        %vm281 = vcmask 15360
        %v282 = vsel %vm281, %v277, 0.0
        %v283 = vsel %vm281, %v278, 0.0
        %v284 = vadd.f32 %v282, %v283
        %v285 = vsel %vm281, %v279, 0.0
        %v286 = vadd.f32 %v284, %v285
        %v287 = vsel %vm281, %v280, 0.0
        %v288 = vadd.f32 %v286, %v287
        %v289 = vrot.slane %v288, 4
        %v290 = vadd.f32 %v288, %v289
        %v291 = vrot.slane %v290, 2
        %v292 = vadd.f32 %v290, %v291
        %v293 = vrot.slane %v292, 1
        %v294 = vadd.f32 %v292, %v293
        %v295 = vmax.f32 %v294, 0.0
        %v296 = vmul.f32 %v230, %v273
        %v297 = vmul.f32 %v231, %v274
        %v298 = vmul.f32 %v232, %v275
        %v299 = vmul.f32 %v233, %v276
        %v300 = vsel %vm281, %v296, 0.0
        %v301 = vsel %vm281, %v297, 0.0
        %v302 = vadd.f32 %v300, %v301
        %v303 = vsel %vm281, %v298, 0.0
        %v304 = vadd.f32 %v302, %v303
        %v305 = vsel %vm281, %v299, 0.0
        %v306 = vadd.f32 %v304, %v305
        %v307 = vrot.slane %v306, 4
        %v308 = vadd.f32 %v306, %v307
        %v309 = vrot.slane %v308, 2
        %v310 = vadd.f32 %v308, %v309
        %v311 = vrot.slane %v310, 1
        %v312 = vadd.f32 %v310, %v311
        %v313 = vmax.f32 %v312, 0.0
        %v314 = vadd.f32 %v295, %v313
        %v315 = vmul.f32 %v234, %v314
        %v316 = vmul.f32 %v235, %v314
        %v317 = vmul.f32 %v236, %v314
        %v318 = vmul.f32 %v237, %v314
        %v319 = vsel %vm281, %v315, 0.0
        %320 = vadd.xlane.f32.xlu0 %v319
        %v321 = vpop.xlane.xlu0 %320
        %v322 = vsel %vm281, %v316, 0.0
        %323 = vadd.xlane.f32.xlu0 %v322
        %v324 = vpop.xlane.xlu0 %323
        %v325 = vsel %vm281, %v317, 0.0
        %326 = vadd.xlane.f32.xlu0 %v325
        %v327 = vpop.xlane.xlu0 %326
        %v328 = vsel %vm281, %v318, 0.0
        %329 = vadd.xlane.f32.xlu0 %v328
        %v330 = vpop.xlane.xlu0 %329
        %v331 = vmul.f32 %v321, 0.5
        %v332 = vmul.f32 %v324, 0.5
        %v333 = vmul.f32 %v327, 0.5
        %v334 = vmul.f32 %v330, 0.5
        %v335 = vtanh.pop %v331
        %v336 = vtanh.pop %v332
        %v337 = vtanh.pop %v333
        %v338 = vtanh.pop %v334
        %v339 = vadd.f32 %v335, 1.0
        %v340 = vadd.f32 %v336, 1.0
        %v341 = vadd.f32 %v337, 1.0
        %v342 = vadd.f32 %v338, 1.0
        %v343 = vmul.f32 %v339, 0.5
        %v344 = vmul.f32 %v340, 0.5
        %v345 = vmul.f32 %v341, 0.5
        %v346 = vmul.f32 %v342, 0.5
        %v347 = vmul.f32 %v240, %v343
        %v348 = vmul.f32 %v241, %v343
        %v349 = vmul.f32 %v242, %v344
        %v350 = vmul.f32 %v243, %v344
        %v351 = vmul.f32 %v244, %v345
        %v352 = vmul.f32 %v245, %v345
        %v353 = vmul.f32 %v246, %v346
        %v354 = vmul.f32 %v247, %v346
        %v355 = vmax.f32 %v347, %v351
        %v356 = vmax.f32 %v349, %v353
        %v357 = vmax.f32 %v355, %v356
        %v358 = vrot.slane %v357, 4
        %v359 = vmax.f32 %v357, %v358
        %v360 = vrot.slane %v359, 2
        %v361 = vmax.f32 %v359, %v360
        %v362 = vrot.slane %v361, 1
        %v363 = vmax.f32 %v361, %v362
        %v364 = vmax.f32 %v348, %v352
        %v365 = vmax.f32 %v350, %v354
        %v366 = vmax.f32 %v364, %v365
        %v367 = vrot.slane %v366, 4
        %v368 = vmax.f32 %v366, %v367
        %v369 = vrot.slane %v368, 2
        %v370 = vmax.f32 %v368, %v369
        %v371 = vrot.slane %v370, 1
        %v372 = vmax.f32 %v370, %v371
        %v375 = vcombine.low %v363, %v372
        %v377 = vunpack.c.l.s4 1966171168
        %v378 = vunpack.c.0.s8 %v377
        %v379 = vlaneseq
        %v380 = vshrl.u32 %v379, 7
        %v381 = vsub.s32 %v378, %v380
        %v382 = vrot.slane %v375, %v381
        %v384 = vunpack.c.l.s4 1966171168
        %v385 = vunpack.c.0.s8 %v384
        %v386 = vlaneseq
        %v387 = vshrl.u32 %v386, 7
        %v388 = vsub.s32 %v385, %v387
        %v389 = vrot.slane %v382, %v388
        %v391 = vlaneseq
        %vm392 = vcmp.ge.s32.totalorder %v391, 0
        %vm393 = vcmp.lt.s32.totalorder %v391, 256
        %vm394 = vmand %vm392, %vm393
        %s395 = scalar_lea.vmem [#allocation2], 2
        %396 = vst.msk [vmem:[%s395] ss:$2 sm:$0x3] %vm394, %v389
        %v397 = vadd.f32 %v347, %v349
        %v398 = vadd.f32 %v397, %v351
        %v399 = vadd.f32 %v398, %v353
        %v400 = vrot.slane %v399, 4
        %v401 = vadd.f32 %v399, %v400
        %v402 = vrot.slane %v401, 2
        %v403 = vadd.f32 %v401, %v402
        %v404 = vrot.slane %v403, 1
        %v405 = vadd.f32 %v403, %v404
        %v406 = vadd.f32 %v348, %v350
        %v407 = vadd.f32 %v406, %v352
        %v408 = vadd.f32 %v407, %v354
        %v409 = vrot.slane %v408, 4
        %v410 = vadd.f32 %v408, %v409
        %v411 = vrot.slane %v410, 2
        %v412 = vadd.f32 %v410, %v411
        %v413 = vrot.slane %v412, 1
        %v414 = vadd.f32 %v412, %v413
        %v415 = vrcp.pop 32.0
        %v416 = vmul.f32 %v405, %v415
        %v417 = vmul.f32 %v414, %v415
        %v420 = vcombine.low %v416, %v417
        %v422 = vunpack.c.l.s4 1966171168
        %v423 = vunpack.c.0.s8 %v422
        %v424 = vlaneseq
        %v425 = vshrl.u32 %v424, 7
        %v426 = vsub.s32 %v423, %v425
        %v427 = vrot.slane %v420, %v426
        %v429 = vunpack.c.l.s4 1966171168
        %v430 = vunpack.c.0.s8 %v429
        %v431 = vlaneseq
        %v432 = vshrl.u32 %v431, 7
        %v433 = vsub.s32 %v430, %v432
        %v434 = vrot.slane %v427, %v433
        %s436 = scalar_lea.vmem [#allocation2], 3
        %437 = vst.msk [vmem:[%s436] ss:$2 sm:$0x3] %vm394, %v434
        %v438 = vlaneseq
        %v439 = vand.u32 %v438, 127
        %v440 = vadd.s32 %v439, 128
        %v441 = vand.u32 %v439, 15
        %v442 = vand.u32 %v440, 15
        %vm443 = vcmp.ge.s32.totalorder %v441, 3
        %vm444 = vcmp.ge.s32.totalorder %v442, 3
        %vm445 = vcmp.ge.s32.totalorder %v441, 2
        %vm446 = vcmp.ge.s32.totalorder %v442, 2
        %vm447 = vcmp.ge.s32.totalorder %v441, 1
        %vm448 = vcmp.ge.s32.totalorder %v442, 1
        %vm449 = vcmp.lt.s32.totalorder %v441, 15
        %vm450 = vcmp.lt.s32.totalorder %v442, 15
        %vm451 = vcmp.lt.s32.totalorder %v441, 14
        %vm452 = vcmp.lt.s32.totalorder %v442, 14
        %vm453 = vcmp.lt.s32.totalorder %v441, 13
        %vm454 = vcmp.lt.s32.totalorder %v442, 13
        %v455 = vlaneseq
        %v456 = vshrl.u32 %v455, 7
        %vm457 = vcmp.lt.s32.totalorder %v456, 1
        %s458 = sld [smem:[#allocation7]]
        %s459 = sld [smem:[#allocation7 + $0x31]]
        %v460 = vstv %s458
        %v461 = vstv %s459
        %v462 = vsel %vm457, %v460, %v461
        %v463 = vld [vmem:[#allocation2] sm:$0x3f]
        %v466 = vunpack.c.l.s4 269488144
        %v467 = vunpack.c.0.s8 %v466
        %v468 = vlaneseq
        %v469 = vshrl.u32 %v468, 7
        %v470 = vsub.s32 %v467, %v469
        %v471 = vrot.slane %v462, %v470
        %v473 = vmul.f32 %v463, %v471
        %v474 = vadd.f32 %v473, 0.0
        %s475 = sld [smem:[#allocation7 + $0x7]]
        %s476 = sld [smem:[#allocation7 + $0x38]]
        %v477 = vstv %s475
        %v478 = vstv %s476
        %v479 = vsel %vm457, %v477, %v478
        %v482 = vunpack.c.l.s4 269488144
        %v483 = vunpack.c.0.s8 %v482
        %v484 = vlaneseq
        %v485 = vshrl.u32 %v484, 7
        %v486 = vsub.s32 %v483, %v485
        %v487 = vrot.slane %v479, %v486
        %v489 = vmul.f32 %v463, %v487
        %491 = vrot.lane.b32.xlu0 %v489, 112
        %v492 = vpop.permute.xlu0 %491
        %v493 = vrot.slane %v492, 2
        %vm494 = vcmask 916480
        %v495 = vsel %vm494, %v492, %v493
        %v497 = vadd.f32 %v474, %v495
        %s498 = sld [smem:[#allocation7 + $0xe]]
        %s499 = sld [smem:[#allocation7 + $0x3f]]
        %v500 = vstv %s498
        %v501 = vstv %s499
        %v502 = vsel %vm457, %v500, %v501
        %v505 = vunpack.c.l.s4 269488144
        %v506 = vunpack.c.0.s8 %v505
        %v507 = vlaneseq
        %v508 = vshrl.u32 %v507, 7
        %v509 = vsub.s32 %v506, %v508
        %v510 = vrot.slane %v502, %v509
        %v512 = vmul.f32 %v463, %v510
        %514 = vrot.lane.b32.xlu0 %v512, 96
        %v515 = vpop.permute.xlu0 %514
        %v516 = vrot.slane %v515, 2
        %vm517 = vcmask 785408
        %v518 = vsel %vm517, %v515, %v516
        %v520 = vadd.f32 %v497, %v518
        %s521 = sld [smem:[#allocation7 + $0x15]]
        %s522 = sld [smem:[#allocation7 + $0x46]]
        %v523 = vstv %s521
        %v524 = vstv %s522
        %v525 = vsel %vm457, %v523, %v524
        %v528 = vunpack.c.l.s4 269488144
        %v529 = vunpack.c.0.s8 %v528
        %v530 = vlaneseq
        %v531 = vshrl.u32 %v530, 7
        %v532 = vsub.s32 %v529, %v531
        %v533 = vrot.slane %v525, %v532
        %v535 = vmul.f32 %v463, %v533
        %537 = vrot.lane.b32.xlu0 %v535, 80
        %v538 = vpop.permute.xlu0 %537
        %v539 = vrot.slane %v538, 2
        %vm540 = vcmask 654336
        %v541 = vsel %vm540, %v538, %v539
        %v543 = vadd.f32 %v520, %v541
        %s544 = sld [smem:[#allocation7 + $0x1c]]
        %s545 = sld [smem:[#allocation7 + $0x4d]]
        %v546 = vstv %s544
        %v547 = vstv %s545
        %v548 = vsel %vm457, %v546, %v547
        %v549 = vld [vmem:[#allocation2 + $0x2] sm:$0x3f]
        %v552 = vunpack.c.l.s4 269488144
        %v553 = vunpack.c.0.s8 %v552
        %v554 = vlaneseq
        %v555 = vshrl.u32 %v554, 7
        %v556 = vsub.s32 %v553, %v555
        %v557 = vrot.slane %v548, %v556
        %v559 = vmul.f32 %v549, %v557
        %561 = vrot.lane.b32.xlu0 %v559, 64
        %v562 = vpop.permute.xlu0 %561
        %v563 = vrot.slane %v562, 6
        %vm564 = vcmask 523264
        %v565 = vsel %vm564, %v563, %v562
        %v567 = vadd.f32 %v543, %v565
        %s568 = sld [smem:[#allocation7 + $0x23]]
        %s569 = sld [smem:[#allocation7 + $0x54]]
        %v570 = vstv %s568
        %v571 = vstv %s569
        %v572 = vsel %vm457, %v570, %v571
        %v575 = vunpack.c.l.s4 269488144
        %v576 = vunpack.c.0.s8 %v575
        %v577 = vlaneseq
        %v578 = vshrl.u32 %v577, 7
        %v579 = vsub.s32 %v576, %v578
        %v580 = vrot.slane %v572, %v579
        %v582 = vmul.f32 %v549, %v580
        %584 = vrot.lane.b32.xlu0 %v582, 48
        %v585 = vpop.permute.xlu0 %584
        %v586 = vrot.slane %v585, 6
        %vm587 = vcmask 392192
        %v588 = vsel %vm587, %v586, %v585
        %v590 = vadd.f32 %v567, %v588
        %s591 = sld [smem:[#allocation7 + $0x2a]]
        %s592 = sld [smem:[#allocation7 + $0x5b]]
        %v593 = vstv %s591
        %v594 = vstv %s592
        %v595 = vsel %vm457, %v593, %v594
        %v598 = vunpack.c.l.s4 269488144
        %v599 = vunpack.c.0.s8 %v598
        %v600 = vlaneseq
        %v601 = vshrl.u32 %v600, 7
        %v602 = vsub.s32 %v599, %v601
        %v603 = vrot.slane %v595, %v602
        %v605 = vmul.f32 %v549, %v603
        %607 = vrot.lane.b32.xlu0 %v605, 32
        %v608 = vpop.permute.xlu0 %607
        %v609 = vrot.slane %v608, 6
        %vm610 = vcmask 261120
        %v611 = vsel %vm610, %v609, %v608
        %v613 = vadd.f32 %v590, %v611
        %v614 = vsel %vm443, 1, 0
        %v615 = vsel %vm444, 1, 0
        %vm616 = vcmp.eq.s32.totalorder %v614, 1
        %vm617 = vcmp.eq.s32.totalorder %v615, 1
        %v619 = vcombine.high %v613, %v613
        %v621 = vunpack.c.l.s4 1983009808
        %v622 = vunpack.c.0.s8 %v621
        %v623 = vlaneseq
        %v624 = vshrl.u32 %v623, 7
        %v625 = vsub.s32 %v622, %v624
        %v626 = vrot.slane %v613, %v625
        %v628 = vunpack.c.l.s4 1983009808
        %v629 = vunpack.c.0.s8 %v628
        %v630 = vlaneseq
        %v631 = vshrl.u32 %v630, 7
        %v632 = vsub.s32 %v629, %v631
        %v633 = vrot.slane %v619, %v632
        %v634 = vcombine.high %v626, %v626
        %635 = vrot.lane.b32.xlu0 %v626, 51
        %v636 = vpop.permute.xlu0 %635
        %637 = vrot.lane.b32.xlu0 %v634, 51
        %v638 = vpop.permute.xlu0 %637
        %639 = vrot.lane.b32.xlu0 %v633, 51
        %v640 = vpop.permute.xlu0 %639
        %vm641 = vcmask 416768
        %v642 = vsel %vm641, %v636, %v638
        %v643 = vsel %vm641, %v638, %v640
        %v646 = vsel %vm616, %v642, 0.0
        %v647 = vsel %vm617, %v643, 0.0
        %v648 = vadd.f32 %v646, 0.0
        %v649 = vadd.f32 %v647, 0.0
        %s650 = sld [smem:[#allocation7 + $0x1]]
        %s651 = sld [smem:[#allocation7 + $0x32]]
        %v652 = vstv %s650
        %v653 = vstv %s651
        %v654 = vsel %vm457, %v652, %v653
        %v655 = vld [vmem:[#allocation2] sm:$0x3f]
        %v658 = vunpack.c.l.s4 269488144
        %v659 = vunpack.c.0.s8 %v658
        %v660 = vlaneseq
        %v661 = vshrl.u32 %v660, 7
        %v662 = vsub.s32 %v659, %v661
        %v663 = vrot.slane %v654, %v662
        %v665 = vmul.f32 %v655, %v663
        %v666 = vadd.f32 %v665, 0.0
        %s667 = sld [smem:[#allocation7 + $0x8]]
        %s668 = sld [smem:[#allocation7 + $0x39]]
        %v669 = vstv %s667
        %v670 = vstv %s668
        %v671 = vsel %vm457, %v669, %v670
        %v674 = vunpack.c.l.s4 269488144
        %v675 = vunpack.c.0.s8 %v674
        %v676 = vlaneseq
        %v677 = vshrl.u32 %v676, 7
        %v678 = vsub.s32 %v675, %v677
        %v679 = vrot.slane %v671, %v678
        %v681 = vmul.f32 %v655, %v679
        %683 = vrot.lane.b32.xlu0 %v681, 112
        %v684 = vpop.permute.xlu0 %683
        %v685 = vrot.slane %v684, 2
        %v686 = vsel %vm494, %v684, %v685
        %v688 = vadd.f32 %v666, %v686
        %s689 = sld [smem:[#allocation7 + $0xf]]
        %s690 = sld [smem:[#allocation7 + $0x40]]
        %v691 = vstv %s689
        %v692 = vstv %s690
        %v693 = vsel %vm457, %v691, %v692
        %v696 = vunpack.c.l.s4 269488144
        %v697 = vunpack.c.0.s8 %v696
        %v698 = vlaneseq
        %v699 = vshrl.u32 %v698, 7
        %v700 = vsub.s32 %v697, %v699
        %v701 = vrot.slane %v693, %v700
        %v703 = vmul.f32 %v655, %v701
        %705 = vrot.lane.b32.xlu0 %v703, 96
        %v706 = vpop.permute.xlu0 %705
        %v707 = vrot.slane %v706, 2
        %v708 = vsel %vm517, %v706, %v707
        %v710 = vadd.f32 %v688, %v708
        %s711 = sld [smem:[#allocation7 + $0x16]]
        %s712 = sld [smem:[#allocation7 + $0x47]]
        %v713 = vstv %s711
        %v714 = vstv %s712
        %v715 = vsel %vm457, %v713, %v714
        %v718 = vunpack.c.l.s4 269488144
        %v719 = vunpack.c.0.s8 %v718
        %v720 = vlaneseq
        %v721 = vshrl.u32 %v720, 7
        %v722 = vsub.s32 %v719, %v721
        %v723 = vrot.slane %v715, %v722
        %v725 = vmul.f32 %v655, %v723
        %727 = vrot.lane.b32.xlu0 %v725, 80
        %v728 = vpop.permute.xlu0 %727
        %v729 = vrot.slane %v728, 2
        %v730 = vsel %vm540, %v728, %v729
        %v732 = vadd.f32 %v710, %v730
        %s733 = sld [smem:[#allocation7 + $0x1d]]
        %s734 = sld [smem:[#allocation7 + $0x4e]]
        %v735 = vstv %s733
        %v736 = vstv %s734
        %v737 = vsel %vm457, %v735, %v736
        %v738 = vld [vmem:[#allocation2 + $0x2] sm:$0x3f]
        %v741 = vunpack.c.l.s4 269488144
        %v742 = vunpack.c.0.s8 %v741
        %v743 = vlaneseq
        %v744 = vshrl.u32 %v743, 7
        %v745 = vsub.s32 %v742, %v744
        %v746 = vrot.slane %v737, %v745
        %v748 = vmul.f32 %v738, %v746
        %750 = vrot.lane.b32.xlu0 %v748, 64
        %v751 = vpop.permute.xlu0 %750
        %v752 = vrot.slane %v751, 6
        %v753 = vsel %vm564, %v752, %v751
        %v755 = vadd.f32 %v732, %v753
        %s756 = sld [smem:[#allocation7 + $0x24]]
        %s757 = sld [smem:[#allocation7 + $0x55]]
        %v758 = vstv %s756
        %v759 = vstv %s757
        %v760 = vsel %vm457, %v758, %v759
        %v763 = vunpack.c.l.s4 269488144
        %v764 = vunpack.c.0.s8 %v763
        %v765 = vlaneseq
        %v766 = vshrl.u32 %v765, 7
        %v767 = vsub.s32 %v764, %v766
        %v768 = vrot.slane %v760, %v767
        %v770 = vmul.f32 %v738, %v768
        %772 = vrot.lane.b32.xlu0 %v770, 48
        %v773 = vpop.permute.xlu0 %772
        %v774 = vrot.slane %v773, 6
        %v775 = vsel %vm587, %v774, %v773
        %v777 = vadd.f32 %v755, %v775
        %s778 = sld [smem:[#allocation7 + $0x2b]]
        %s779 = sld [smem:[#allocation7 + $0x5c]]
        %v780 = vstv %s778
        %v781 = vstv %s779
        %v782 = vsel %vm457, %v780, %v781
        %v785 = vunpack.c.l.s4 269488144
        %v786 = vunpack.c.0.s8 %v785
        %v787 = vlaneseq
        %v788 = vshrl.u32 %v787, 7
        %v789 = vsub.s32 %v786, %v788
        %v790 = vrot.slane %v782, %v789
        %v792 = vmul.f32 %v738, %v790
        %794 = vrot.lane.b32.xlu0 %v792, 32
        %v795 = vpop.permute.xlu0 %794
        %v796 = vrot.slane %v795, 6
        %v797 = vsel %vm610, %v796, %v795
        %v799 = vadd.f32 %v777, %v797
        %v800 = vsel %vm445, 1, 0
        %v801 = vsel %vm446, 1, 0
        %vm802 = vcmp.eq.s32.totalorder %v800, 1
        %vm803 = vcmp.eq.s32.totalorder %v801, 1
        %v805 = vcombine.high %v799, %v799
        %v807 = vunpack.c.l.s4 1983009808
        %v808 = vunpack.c.0.s8 %v807
        %v809 = vlaneseq
        %v810 = vshrl.u32 %v809, 7
        %v811 = vsub.s32 %v808, %v810
        %v812 = vrot.slane %v799, %v811
        %v814 = vunpack.c.l.s4 1983009808
        %v815 = vunpack.c.0.s8 %v814
        %v816 = vlaneseq
        %v817 = vshrl.u32 %v816, 7
        %v818 = vsub.s32 %v815, %v817
        %v819 = vrot.slane %v805, %v818
        %v820 = vcombine.high %v812, %v812
        %821 = vrot.lane.b32.xlu0 %v812, 50
        %v822 = vpop.permute.xlu0 %821
        %823 = vrot.lane.b32.xlu0 %v820, 50
        %v824 = vpop.permute.xlu0 %823
        %825 = vrot.lane.b32.xlu0 %v819, 50
        %v826 = vpop.permute.xlu0 %825
        %vm827 = vcmask 408576
        %v828 = vsel %vm827, %v822, %v824
        %v829 = vsel %vm827, %v824, %v826
        %v832 = vsel %vm802, %v828, 0.0
        %v833 = vsel %vm803, %v829, 0.0
        %v834 = vadd.f32 %v648, %v832
        %v835 = vadd.f32 %v649, %v833
        %s836 = sld [smem:[#allocation7 + $0x2]]
        %s837 = sld [smem:[#allocation7 + $0x33]]
        %v838 = vstv %s836
        %v839 = vstv %s837
        %v840 = vsel %vm457, %v838, %v839
        %v841 = vld [vmem:[#allocation2] sm:$0x3f]
        %v844 = vunpack.c.l.s4 269488144
        %v845 = vunpack.c.0.s8 %v844
        %v846 = vlaneseq
        %v847 = vshrl.u32 %v846, 7
        %v848 = vsub.s32 %v845, %v847
        %v849 = vrot.slane %v840, %v848
        %v851 = vmul.f32 %v841, %v849
        %v852 = vadd.f32 %v851, 0.0
        %s853 = sld [smem:[#allocation7 + $0x9]]
        %s854 = sld [smem:[#allocation7 + $0x3a]]
        %v855 = vstv %s853
        %v856 = vstv %s854
        %v857 = vsel %vm457, %v855, %v856
        %v860 = vunpack.c.l.s4 269488144
        %v861 = vunpack.c.0.s8 %v860
        %v862 = vlaneseq
        %v863 = vshrl.u32 %v862, 7
        %v864 = vsub.s32 %v861, %v863
        %v865 = vrot.slane %v857, %v864
        %v867 = vmul.f32 %v841, %v865
        %869 = vrot.lane.b32.xlu0 %v867, 112
        %v870 = vpop.permute.xlu0 %869
        %v871 = vrot.slane %v870, 2
        %v872 = vsel %vm494, %v870, %v871
        %v874 = vadd.f32 %v852, %v872
        %s875 = sld [smem:[#allocation7 + $0x10]]
        %s876 = sld [smem:[#allocation7 + $0x41]]
        %v877 = vstv %s875
        %v878 = vstv %s876
        %v879 = vsel %vm457, %v877, %v878
        %v882 = vunpack.c.l.s4 269488144
        %v883 = vunpack.c.0.s8 %v882
        %v884 = vlaneseq
        %v885 = vshrl.u32 %v884, 7
        %v886 = vsub.s32 %v883, %v885
        %v887 = vrot.slane %v879, %v886
        %v889 = vmul.f32 %v841, %v887
        %891 = vrot.lane.b32.xlu0 %v889, 96
        %v892 = vpop.permute.xlu0 %891
        %v893 = vrot.slane %v892, 2
        %v894 = vsel %vm517, %v892, %v893
        %v896 = vadd.f32 %v874, %v894
        %s897 = sld [smem:[#allocation7 + $0x17]]
        %s898 = sld [smem:[#allocation7 + $0x48]]
        %v899 = vstv %s897
        %v900 = vstv %s898
        %v901 = vsel %vm457, %v899, %v900
        %v904 = vunpack.c.l.s4 269488144
        %v905 = vunpack.c.0.s8 %v904
        %v906 = vlaneseq
        %v907 = vshrl.u32 %v906, 7
        %v908 = vsub.s32 %v905, %v907
        %v909 = vrot.slane %v901, %v908
        %v911 = vmul.f32 %v841, %v909
        %913 = vrot.lane.b32.xlu0 %v911, 80
        %v914 = vpop.permute.xlu0 %913
        %v915 = vrot.slane %v914, 2
        %v916 = vsel %vm540, %v914, %v915
        %v918 = vadd.f32 %v896, %v916
        %s919 = sld [smem:[#allocation7 + $0x1e]]
        %s920 = sld [smem:[#allocation7 + $0x4f]]
        %v921 = vstv %s919
        %v922 = vstv %s920
        %v923 = vsel %vm457, %v921, %v922
        %v924 = vld [vmem:[#allocation2 + $0x2] sm:$0x3f]
        %v927 = vunpack.c.l.s4 269488144
        %v928 = vunpack.c.0.s8 %v927
        %v929 = vlaneseq
        %v930 = vshrl.u32 %v929, 7
        %v931 = vsub.s32 %v928, %v930
        %v932 = vrot.slane %v923, %v931
        %v934 = vmul.f32 %v924, %v932
        %936 = vrot.lane.b32.xlu0 %v934, 64
        %v937 = vpop.permute.xlu0 %936
        %v938 = vrot.slane %v937, 6
        %v939 = vsel %vm564, %v938, %v937
        %v941 = vadd.f32 %v918, %v939
        %s942 = sld [smem:[#allocation7 + $0x25]]
        %s943 = sld [smem:[#allocation7 + $0x56]]
        %v944 = vstv %s942
        %v945 = vstv %s943
        %v946 = vsel %vm457, %v944, %v945
        %v949 = vunpack.c.l.s4 269488144
        %v950 = vunpack.c.0.s8 %v949
        %v951 = vlaneseq
        %v952 = vshrl.u32 %v951, 7
        %v953 = vsub.s32 %v950, %v952
        %v954 = vrot.slane %v946, %v953
        %v956 = vmul.f32 %v924, %v954
        %958 = vrot.lane.b32.xlu0 %v956, 48
        %v959 = vpop.permute.xlu0 %958
        %v960 = vrot.slane %v959, 6
        %v961 = vsel %vm587, %v960, %v959
        %v963 = vadd.f32 %v941, %v961
        %s964 = sld [smem:[#allocation7 + $0x2c]]
        %s965 = sld [smem:[#allocation7 + $0x5d]]
        %v966 = vstv %s964
        %v967 = vstv %s965
        %v968 = vsel %vm457, %v966, %v967
        %v971 = vunpack.c.l.s4 269488144
        %v972 = vunpack.c.0.s8 %v971
        %v973 = vlaneseq
        %v974 = vshrl.u32 %v973, 7
        %v975 = vsub.s32 %v972, %v974
        %v976 = vrot.slane %v968, %v975
        %v978 = vmul.f32 %v924, %v976
        %980 = vrot.lane.b32.xlu0 %v978, 32
        %v981 = vpop.permute.xlu0 %980
        %v982 = vrot.slane %v981, 6
        %v983 = vsel %vm610, %v982, %v981
        %v985 = vadd.f32 %v963, %v983
        %v986 = vsel %vm447, 1, 0
        %v987 = vsel %vm448, 1, 0
        %vm988 = vcmp.eq.s32.totalorder %v986, 1
        %vm989 = vcmp.eq.s32.totalorder %v987, 1
        %v991 = vcombine.high %v985, %v985
        %v993 = vunpack.c.l.s4 1983009808
        %v994 = vunpack.c.0.s8 %v993
        %v995 = vlaneseq
        %v996 = vshrl.u32 %v995, 7
        %v997 = vsub.s32 %v994, %v996
        %v998 = vrot.slane %v985, %v997
        %v1000 = vunpack.c.l.s4 1983009808
        %v1001 = vunpack.c.0.s8 %v1000
        %v1002 = vlaneseq
        %v1003 = vshrl.u32 %v1002, 7
        %v1004 = vsub.s32 %v1001, %v1003
        %v1005 = vrot.slane %v991, %v1004
        %v1006 = vcombine.high %v998, %v998
        %1007 = vrot.lane.b32.xlu0 %v998, 49
        %v1008 = vpop.permute.xlu0 %1007
        %1009 = vrot.lane.b32.xlu0 %v1006, 49
        %v1010 = vpop.permute.xlu0 %1009
        %1011 = vrot.lane.b32.xlu0 %v1005, 49
        %v1012 = vpop.permute.xlu0 %1011
        %vm1013 = vcmask 400384
        %v1014 = vsel %vm1013, %v1008, %v1010
        %v1015 = vsel %vm1013, %v1010, %v1012
        %v1018 = vsel %vm988, %v1014, 0.0
        %v1019 = vsel %vm989, %v1015, 0.0
        %v1020 = vadd.f32 %v834, %v1018
        %v1021 = vadd.f32 %v835, %v1019
        %s1022 = sld [smem:[#allocation7 + $0x3]]
        %s1023 = sld [smem:[#allocation7 + $0x34]]
        %v1024 = vstv %s1022
        %v1025 = vstv %s1023
        %v1026 = vsel %vm457, %v1024, %v1025
        %v1027 = vld [vmem:[#allocation2] sm:$0x3f]
        %v1030 = vunpack.c.l.s4 269488144
        %v1031 = vunpack.c.0.s8 %v1030
        %v1032 = vlaneseq
        %v1033 = vshrl.u32 %v1032, 7
        %v1034 = vsub.s32 %v1031, %v1033
        %v1035 = vrot.slane %v1026, %v1034
        %v1037 = vmul.f32 %v1027, %v1035
        %v1038 = vadd.f32 %v1037, 0.0
        %s1039 = sld [smem:[#allocation7 + $0xa]]
        %s1040 = sld [smem:[#allocation7 + $0x3b]]
        %v1041 = vstv %s1039
        %v1042 = vstv %s1040
        %v1043 = vsel %vm457, %v1041, %v1042
        %v1046 = vunpack.c.l.s4 269488144
        %v1047 = vunpack.c.0.s8 %v1046
        %v1048 = vlaneseq
        %v1049 = vshrl.u32 %v1048, 7
        %v1050 = vsub.s32 %v1047, %v1049
        %v1051 = vrot.slane %v1043, %v1050
        %v1053 = vmul.f32 %v1027, %v1051
        %1055 = vrot.lane.b32.xlu0 %v1053, 112
        %v1056 = vpop.permute.xlu0 %1055
        %v1057 = vrot.slane %v1056, 2
        %v1058 = vsel %vm494, %v1056, %v1057
        %v1060 = vadd.f32 %v1038, %v1058
        %s1061 = sld [smem:[#allocation7 + $0x11]]
        %s1062 = sld [smem:[#allocation7 + $0x42]]
        %v1063 = vstv %s1061
        %v1064 = vstv %s1062
        %v1065 = vsel %vm457, %v1063, %v1064
        %v1068 = vunpack.c.l.s4 269488144
        %v1069 = vunpack.c.0.s8 %v1068
        %v1070 = vlaneseq
        %v1071 = vshrl.u32 %v1070, 7
        %v1072 = vsub.s32 %v1069, %v1071
        %v1073 = vrot.slane %v1065, %v1072
        %v1075 = vmul.f32 %v1027, %v1073
        %1077 = vrot.lane.b32.xlu0 %v1075, 96
        %v1078 = vpop.permute.xlu0 %1077
        %v1079 = vrot.slane %v1078, 2
        %v1080 = vsel %vm517, %v1078, %v1079
        %v1082 = vadd.f32 %v1060, %v1080
        %s1083 = sld [smem:[#allocation7 + $0x18]]
        %s1084 = sld [smem:[#allocation7 + $0x49]]
        %v1085 = vstv %s1083
        %v1086 = vstv %s1084
        %v1087 = vsel %vm457, %v1085, %v1086
        %v1088 = vld [vmem:[#allocation2 + $0x2] sm:$0xf]
        %v1091 = vunpack.c.l.s4 269488144
        %v1092 = vunpack.c.0.s8 %v1091
        %v1093 = vlaneseq
        %v1094 = vshrl.u32 %v1093, 7
        %v1095 = vsub.s32 %v1092, %v1094
        %v1096 = vrot.slane %v1087, %v1095
        %v1098 = vmul.f32 %v1088, %v1096
        %1100 = vrot.lane.b32.xlu0 %v1098, 80
        %v1101 = vpop.permute.xlu0 %1100
        %v1102 = vrot.slane %v1101, 6
        %v1103 = vsel %vm540, %v1102, %v1101
        %v1105 = vadd.f32 %v1082, %v1103
        %s1106 = sld [smem:[#allocation7 + $0x1f]]
        %s1107 = sld [smem:[#allocation7 + $0x50]]
        %v1108 = vstv %s1106
        %v1109 = vstv %s1107
        %v1110 = vsel %vm457, %v1108, %v1109
        %v1111 = vld [vmem:[#allocation2 + $0x2] sm:$0x3f]
        %v1114 = vunpack.c.l.s4 269488144
        %v1115 = vunpack.c.0.s8 %v1114
        %v1116 = vlaneseq
        %v1117 = vshrl.u32 %v1116, 7
        %v1118 = vsub.s32 %v1115, %v1117
        %v1119 = vrot.slane %v1110, %v1118
        %v1121 = vmul.f32 %v1111, %v1119
        %1123 = vrot.lane.b32.xlu0 %v1121, 64
        %v1124 = vpop.permute.xlu0 %1123
        %v1125 = vrot.slane %v1124, 6
        %v1126 = vsel %vm564, %v1125, %v1124
        %v1128 = vadd.f32 %v1105, %v1126
        %s1129 = sld [smem:[#allocation7 + $0x26]]
        %s1130 = sld [smem:[#allocation7 + $0x57]]
        %v1131 = vstv %s1129
        %v1132 = vstv %s1130
        %v1133 = vsel %vm457, %v1131, %v1132
        %v1136 = vunpack.c.l.s4 269488144
        %v1137 = vunpack.c.0.s8 %v1136
        %v1138 = vlaneseq
        %v1139 = vshrl.u32 %v1138, 7
        %v1140 = vsub.s32 %v1137, %v1139
        %v1141 = vrot.slane %v1133, %v1140
        %v1143 = vmul.f32 %v1111, %v1141
        %1145 = vrot.lane.b32.xlu0 %v1143, 48
        %v1146 = vpop.permute.xlu0 %1145
        %v1147 = vrot.slane %v1146, 6
        %v1148 = vsel %vm587, %v1147, %v1146
        %v1150 = vadd.f32 %v1128, %v1148
        %s1151 = sld [smem:[#allocation7 + $0x2d]]
        %s1152 = sld [smem:[#allocation7 + $0x5e]]
        %v1153 = vstv %s1151
        %v1154 = vstv %s1152
        %v1155 = vsel %vm457, %v1153, %v1154
        %v1158 = vunpack.c.l.s4 269488144
        %v1159 = vunpack.c.0.s8 %v1158
        %v1160 = vlaneseq
        %v1161 = vshrl.u32 %v1160, 7
        %v1162 = vsub.s32 %v1159, %v1161
        %v1163 = vrot.slane %v1155, %v1162
        %v1165 = vmul.f32 %v1111, %v1163
        %1167 = vrot.lane.b32.xlu0 %v1165, 32
        %v1168 = vpop.permute.xlu0 %1167
        %v1169 = vrot.slane %v1168, 6
        %v1170 = vsel %vm610, %v1169, %v1168
        %v1172 = vadd.f32 %v1150, %v1170
        %v1174 = vcombine.high %v1172, %v1172
        %v1176 = vunpack.c.l.s4 1983009808
        %v1177 = vunpack.c.0.s8 %v1176
        %v1178 = vlaneseq
        %v1179 = vshrl.u32 %v1178, 7
        %v1180 = vsub.s32 %v1177, %v1179
        %v1181 = vrot.slane %v1172, %v1180
        %v1183 = vunpack.c.l.s4 1983009808
        %v1184 = vunpack.c.0.s8 %v1183
        %v1185 = vlaneseq
        %v1186 = vshrl.u32 %v1185, 7
        %v1187 = vsub.s32 %v1184, %v1186
        %v1188 = vrot.slane %v1174, %v1187
        %v1189 = vcombine.high %v1181, %v1181
        %1190 = vrot.lane.b32.xlu0 %v1181, 48
        %v1191 = vpop.permute.xlu0 %1190
        %1192 = vrot.lane.b32.xlu0 %v1189, 48
        %v1193 = vpop.permute.xlu0 %1192
        %1194 = vrot.lane.b32.xlu0 %v1188, 48
        %v1195 = vpop.permute.xlu0 %1194
        %v1196 = vsel %vm587, %v1191, %v1193
        %v1197 = vsel %vm587, %v1193, %v1195
        %v1200 = vadd.f32 %v1020, %v1196
        %v1201 = vadd.f32 %v1021, %v1197
        %s1202 = sld [smem:[#allocation7 + $0x4]]
        %s1203 = sld [smem:[#allocation7 + $0x35]]
        %v1204 = vstv %s1202
        %v1205 = vstv %s1203
        %v1206 = vsel %vm457, %v1204, %v1205
        %v1207 = vld [vmem:[#allocation2] sm:$0x3f]
        %v1210 = vunpack.c.l.s4 269488144
        %v1211 = vunpack.c.0.s8 %v1210
        %v1212 = vlaneseq
        %v1213 = vshrl.u32 %v1212, 7
        %v1214 = vsub.s32 %v1211, %v1213
        %v1215 = vrot.slane %v1206, %v1214
        %v1217 = vmul.f32 %v1207, %v1215
        %v1218 = vadd.f32 %v1217, 0.0
        %s1219 = sld [smem:[#allocation7 + $0xb]]
        %s1220 = sld [smem:[#allocation7 + $0x3c]]
        %v1221 = vstv %s1219
        %v1222 = vstv %s1220
        %v1223 = vsel %vm457, %v1221, %v1222
        %v1226 = vunpack.c.l.s4 269488144
        %v1227 = vunpack.c.0.s8 %v1226
        %v1228 = vlaneseq
        %v1229 = vshrl.u32 %v1228, 7
        %v1230 = vsub.s32 %v1227, %v1229
        %v1231 = vrot.slane %v1223, %v1230
        %v1233 = vmul.f32 %v1207, %v1231
        %1235 = vrot.lane.b32.xlu0 %v1233, 112
        %v1236 = vpop.permute.xlu0 %1235
        %v1237 = vrot.slane %v1236, 2
        %v1238 = vsel %vm494, %v1236, %v1237
        %v1240 = vadd.f32 %v1218, %v1238
        %s1241 = sld [smem:[#allocation7 + $0x12]]
        %s1242 = sld [smem:[#allocation7 + $0x43]]
        %v1243 = vstv %s1241
        %v1244 = vstv %s1242
        %v1245 = vsel %vm457, %v1243, %v1244
        %v1248 = vunpack.c.l.s4 269488144
        %v1249 = vunpack.c.0.s8 %v1248
        %v1250 = vlaneseq
        %v1251 = vshrl.u32 %v1250, 7
        %v1252 = vsub.s32 %v1249, %v1251
        %v1253 = vrot.slane %v1245, %v1252
        %v1255 = vmul.f32 %v1207, %v1253
        %1257 = vrot.lane.b32.xlu0 %v1255, 96
        %v1258 = vpop.permute.xlu0 %1257
        %v1259 = vrot.slane %v1258, 2
        %v1260 = vsel %vm517, %v1258, %v1259
        %v1262 = vadd.f32 %v1240, %v1260
        %s1263 = sld [smem:[#allocation7 + $0x19]]
        %s1264 = sld [smem:[#allocation7 + $0x4a]]
        %v1265 = vstv %s1263
        %v1266 = vstv %s1264
        %v1267 = vsel %vm457, %v1265, %v1266
        %v1268 = vld [vmem:[#allocation2 + $0x2] sm:$0x3f]
        %v1271 = vunpack.c.l.s4 269488144
        %v1272 = vunpack.c.0.s8 %v1271
        %v1273 = vlaneseq
        %v1274 = vshrl.u32 %v1273, 7
        %v1275 = vsub.s32 %v1272, %v1274
        %v1276 = vrot.slane %v1267, %v1275
        %v1278 = vmul.f32 %v1268, %v1276
        %1280 = vrot.lane.b32.xlu0 %v1278, 80
        %v1281 = vpop.permute.xlu0 %1280
        %v1282 = vrot.slane %v1281, 6
        %v1283 = vsel %vm540, %v1282, %v1281
        %v1285 = vadd.f32 %v1262, %v1283
        %s1286 = sld [smem:[#allocation7 + $0x20]]
        %s1287 = sld [smem:[#allocation7 + $0x51]]
        %v1288 = vstv %s1286
        %v1289 = vstv %s1287
        %v1290 = vsel %vm457, %v1288, %v1289
        %v1293 = vunpack.c.l.s4 269488144
        %v1294 = vunpack.c.0.s8 %v1293
        %v1295 = vlaneseq
        %v1296 = vshrl.u32 %v1295, 7
        %v1297 = vsub.s32 %v1294, %v1296
        %v1298 = vrot.slane %v1290, %v1297
        %v1300 = vmul.f32 %v1268, %v1298
        %1302 = vrot.lane.b32.xlu0 %v1300, 64
        %v1303 = vpop.permute.xlu0 %1302
        %v1304 = vrot.slane %v1303, 6
        %v1305 = vsel %vm564, %v1304, %v1303
        %v1307 = vadd.f32 %v1285, %v1305
        %s1308 = sld [smem:[#allocation7 + $0x27]]
        %s1309 = sld [smem:[#allocation7 + $0x58]]
        %v1310 = vstv %s1308
        %v1311 = vstv %s1309
        %v1312 = vsel %vm457, %v1310, %v1311
        %v1315 = vunpack.c.l.s4 269488144
        %v1316 = vunpack.c.0.s8 %v1315
        %v1317 = vlaneseq
        %v1318 = vshrl.u32 %v1317, 7
        %v1319 = vsub.s32 %v1316, %v1318
        %v1320 = vrot.slane %v1312, %v1319
        %v1322 = vmul.f32 %v1268, %v1320
        %1324 = vrot.lane.b32.xlu0 %v1322, 48
        %v1325 = vpop.permute.xlu0 %1324
        %v1326 = vrot.slane %v1325, 6
        %v1327 = vsel %vm587, %v1326, %v1325
        %v1329 = vadd.f32 %v1307, %v1327
        %s1330 = sld [smem:[#allocation7 + $0x2e]]
        %s1331 = sld [smem:[#allocation7 + $0x5f]]
        %v1332 = vstv %s1330
        %v1333 = vstv %s1331
        %v1334 = vsel %vm457, %v1332, %v1333
        %v1337 = vunpack.c.l.s4 269488144
        %v1338 = vunpack.c.0.s8 %v1337
        %v1339 = vlaneseq
        %v1340 = vshrl.u32 %v1339, 7
        %v1341 = vsub.s32 %v1338, %v1340
        %v1342 = vrot.slane %v1334, %v1341
        %v1344 = vmul.f32 %v1268, %v1342
        %1346 = vrot.lane.b32.xlu0 %v1344, 32
        %v1347 = vpop.permute.xlu0 %1346
        %v1348 = vrot.slane %v1347, 6
        %v1349 = vsel %vm610, %v1348, %v1347
        %v1351 = vadd.f32 %v1329, %v1349
        %v1352 = vsel %vm449, 1, 0
        %v1353 = vsel %vm450, 1, 0
        %vm1354 = vcmp.eq.s32.totalorder %v1352, 1
        %vm1355 = vcmp.eq.s32.totalorder %v1353, 1
        %v1357 = vcombine.high %v1351, %v1351
        %v1359 = vunpack.c.l.s4 1983009808
        %v1360 = vunpack.c.0.s8 %v1359
        %v1361 = vlaneseq
        %v1362 = vshrl.u32 %v1361, 7
        %v1363 = vsub.s32 %v1360, %v1362
        %v1364 = vrot.slane %v1351, %v1363
        %v1366 = vunpack.c.l.s4 1983009808
        %v1367 = vunpack.c.0.s8 %v1366
        %v1368 = vlaneseq
        %v1369 = vshrl.u32 %v1368, 7
        %v1370 = vsub.s32 %v1367, %v1369
        %v1371 = vrot.slane %v1357, %v1370
        %v1372 = vcombine.high %v1364, %v1364
        %1373 = vrot.lane.b32.xlu0 %v1364, 47
        %v1374 = vpop.permute.xlu0 %1373
        %1375 = vrot.lane.b32.xlu0 %v1372, 47
        %v1376 = vpop.permute.xlu0 %1375
        %1377 = vrot.lane.b32.xlu0 %v1371, 47
        %v1378 = vpop.permute.xlu0 %1377
        %vm1379 = vcmask 384000
        %v1380 = vsel %vm1379, %v1374, %v1376
        %v1381 = vsel %vm1379, %v1376, %v1378
        %v1384 = vsel %vm1354, %v1380, 0.0
        %v1385 = vsel %vm1355, %v1381, 0.0
        %v1386 = vadd.f32 %v1200, %v1384
        %v1387 = vadd.f32 %v1201, %v1385
        %s1388 = sld [smem:[#allocation7 + $0x5]]
        %s1389 = sld [smem:[#allocation7 + $0x36]]
        %v1390 = vstv %s1388
        %v1391 = vstv %s1389
        %v1392 = vsel %vm457, %v1390, %v1391
        %v1393 = vld [vmem:[#allocation2] sm:$0x3f]
        %v1396 = vunpack.c.l.s4 269488144
        %v1397 = vunpack.c.0.s8 %v1396
        %v1398 = vlaneseq
        %v1399 = vshrl.u32 %v1398, 7
        %v1400 = vsub.s32 %v1397, %v1399
        %v1401 = vrot.slane %v1392, %v1400
        %v1403 = vmul.f32 %v1393, %v1401
        %v1404 = vadd.f32 %v1403, 0.0
        %s1405 = sld [smem:[#allocation7 + $0xc]]
        %s1406 = sld [smem:[#allocation7 + $0x3d]]
        %v1407 = vstv %s1405
        %v1408 = vstv %s1406
        %v1409 = vsel %vm457, %v1407, %v1408
        %v1412 = vunpack.c.l.s4 269488144
        %v1413 = vunpack.c.0.s8 %v1412
        %v1414 = vlaneseq
        %v1415 = vshrl.u32 %v1414, 7
        %v1416 = vsub.s32 %v1413, %v1415
        %v1417 = vrot.slane %v1409, %v1416
        %v1419 = vmul.f32 %v1393, %v1417
        %1421 = vrot.lane.b32.xlu0 %v1419, 112
        %v1422 = vpop.permute.xlu0 %1421
        %v1423 = vrot.slane %v1422, 2
        %v1424 = vsel %vm494, %v1422, %v1423
        %v1426 = vadd.f32 %v1404, %v1424
        %s1427 = sld [smem:[#allocation7 + $0x13]]
        %s1428 = sld [smem:[#allocation7 + $0x44]]
        %v1429 = vstv %s1427
        %v1430 = vstv %s1428
        %v1431 = vsel %vm457, %v1429, %v1430
        %v1434 = vunpack.c.l.s4 269488144
        %v1435 = vunpack.c.0.s8 %v1434
        %v1436 = vlaneseq
        %v1437 = vshrl.u32 %v1436, 7
        %v1438 = vsub.s32 %v1435, %v1437
        %v1439 = vrot.slane %v1431, %v1438
        %v1441 = vmul.f32 %v1393, %v1439
        %1443 = vrot.lane.b32.xlu0 %v1441, 96
        %v1444 = vpop.permute.xlu0 %1443
        %v1445 = vrot.slane %v1444, 2
        %v1446 = vsel %vm517, %v1444, %v1445
        %v1448 = vadd.f32 %v1426, %v1446
        %s1449 = sld [smem:[#allocation7 + $0x1a]]
        %s1450 = sld [smem:[#allocation7 + $0x4b]]
        %v1451 = vstv %s1449
        %v1452 = vstv %s1450
        %v1453 = vsel %vm457, %v1451, %v1452
        %v1454 = vld [vmem:[#allocation2 + $0x2] sm:$0x3f]
        %v1457 = vunpack.c.l.s4 269488144
        %v1458 = vunpack.c.0.s8 %v1457
        %v1459 = vlaneseq
        %v1460 = vshrl.u32 %v1459, 7
        %v1461 = vsub.s32 %v1458, %v1460
        %v1462 = vrot.slane %v1453, %v1461
        %v1464 = vmul.f32 %v1454, %v1462
        %1466 = vrot.lane.b32.xlu0 %v1464, 80
        %v1467 = vpop.permute.xlu0 %1466
        %v1468 = vrot.slane %v1467, 6
        %v1469 = vsel %vm540, %v1468, %v1467
        %v1471 = vadd.f32 %v1448, %v1469
        %s1472 = sld [smem:[#allocation7 + $0x21]]
        %s1473 = sld [smem:[#allocation7 + $0x52]]
        %v1474 = vstv %s1472
        %v1475 = vstv %s1473
        %v1476 = vsel %vm457, %v1474, %v1475
        %v1479 = vunpack.c.l.s4 269488144
        %v1480 = vunpack.c.0.s8 %v1479
        %v1481 = vlaneseq
        %v1482 = vshrl.u32 %v1481, 7
        %v1483 = vsub.s32 %v1480, %v1482
        %v1484 = vrot.slane %v1476, %v1483
        %v1486 = vmul.f32 %v1454, %v1484
        %1488 = vrot.lane.b32.xlu0 %v1486, 64
        %v1489 = vpop.permute.xlu0 %1488
        %v1490 = vrot.slane %v1489, 6
        %v1491 = vsel %vm564, %v1490, %v1489
        %v1493 = vadd.f32 %v1471, %v1491
        %s1494 = sld [smem:[#allocation7 + $0x28]]
        %s1495 = sld [smem:[#allocation7 + $0x59]]
        %v1496 = vstv %s1494
        %v1497 = vstv %s1495
        %v1498 = vsel %vm457, %v1496, %v1497
        %v1501 = vunpack.c.l.s4 269488144
        %v1502 = vunpack.c.0.s8 %v1501
        %v1503 = vlaneseq
        %v1504 = vshrl.u32 %v1503, 7
        %v1505 = vsub.s32 %v1502, %v1504
        %v1506 = vrot.slane %v1498, %v1505
        %v1508 = vmul.f32 %v1454, %v1506
        %1510 = vrot.lane.b32.xlu0 %v1508, 48
        %v1511 = vpop.permute.xlu0 %1510
        %v1512 = vrot.slane %v1511, 6
        %v1513 = vsel %vm587, %v1512, %v1511
        %v1515 = vadd.f32 %v1493, %v1513
        %s1516 = sld [smem:[#allocation7 + $0x2f]]
        %s1517 = sld [smem:[#allocation7 + $0x60]]
        %v1518 = vstv %s1516
        %v1519 = vstv %s1517
        %v1520 = vsel %vm457, %v1518, %v1519
        %v1523 = vunpack.c.l.s4 269488144
        %v1524 = vunpack.c.0.s8 %v1523
        %v1525 = vlaneseq
        %v1526 = vshrl.u32 %v1525, 7
        %v1527 = vsub.s32 %v1524, %v1526
        %v1528 = vrot.slane %v1520, %v1527
        %v1530 = vmul.f32 %v1454, %v1528
        %1532 = vrot.lane.b32.xlu0 %v1530, 32
        %v1533 = vpop.permute.xlu0 %1532
        %v1534 = vrot.slane %v1533, 6
        %v1535 = vsel %vm610, %v1534, %v1533
        %v1537 = vadd.f32 %v1515, %v1535
        %v1538 = vsel %vm451, 1, 0
        %v1539 = vsel %vm452, 1, 0
        %vm1540 = vcmp.eq.s32.totalorder %v1538, 1
        %vm1541 = vcmp.eq.s32.totalorder %v1539, 1
        %v1543 = vcombine.high %v1537, %v1537
        %v1545 = vunpack.c.l.s4 1983009808
        %v1546 = vunpack.c.0.s8 %v1545
        %v1547 = vlaneseq
        %v1548 = vshrl.u32 %v1547, 7
        %v1549 = vsub.s32 %v1546, %v1548
        %v1550 = vrot.slane %v1537, %v1549
        %v1552 = vunpack.c.l.s4 1983009808
        %v1553 = vunpack.c.0.s8 %v1552
        %v1554 = vlaneseq
        %v1555 = vshrl.u32 %v1554, 7
        %v1556 = vsub.s32 %v1553, %v1555
        %v1557 = vrot.slane %v1543, %v1556
        %v1558 = vcombine.high %v1550, %v1550
        %1559 = vrot.lane.b32.xlu0 %v1550, 46
        %v1560 = vpop.permute.xlu0 %1559
        %1561 = vrot.lane.b32.xlu0 %v1558, 46
        %v1562 = vpop.permute.xlu0 %1561
        %1563 = vrot.lane.b32.xlu0 %v1557, 46
        %v1564 = vpop.permute.xlu0 %1563
        %vm1565 = vcmask 375808
        %v1566 = vsel %vm1565, %v1560, %v1562
        %v1567 = vsel %vm1565, %v1562, %v1564
        %v1570 = vsel %vm1540, %v1566, 0.0
        %v1571 = vsel %vm1541, %v1567, 0.0
        %v1572 = vadd.f32 %v1386, %v1570
        %v1573 = vadd.f32 %v1387, %v1571
        %s1574 = sld [smem:[#allocation7 + $0x6]]
        %s1575 = sld [smem:[#allocation7 + $0x37]]
        %v1576 = vstv %s1574
        %v1577 = vstv %s1575
        %v1578 = vsel %vm457, %v1576, %v1577
        %v1579 = vld [vmem:[#allocation2] sm:$0x3f]
        %v1582 = vunpack.c.l.s4 269488144
        %v1583 = vunpack.c.0.s8 %v1582
        %v1584 = vlaneseq
        %v1585 = vshrl.u32 %v1584, 7
        %v1586 = vsub.s32 %v1583, %v1585
        %v1587 = vrot.slane %v1578, %v1586
        %v1589 = vmul.f32 %v1579, %v1587
        %v1590 = vadd.f32 %v1589, 0.0
        %s1591 = sld [smem:[#allocation7 + $0xd]]
        %s1592 = sld [smem:[#allocation7 + $0x3e]]
        %v1593 = vstv %s1591
        %v1594 = vstv %s1592
        %v1595 = vsel %vm457, %v1593, %v1594
        %v1598 = vunpack.c.l.s4 269488144
        %v1599 = vunpack.c.0.s8 %v1598
        %v1600 = vlaneseq
        %v1601 = vshrl.u32 %v1600, 7
        %v1602 = vsub.s32 %v1599, %v1601
        %v1603 = vrot.slane %v1595, %v1602
        %v1605 = vmul.f32 %v1579, %v1603
        %1607 = vrot.lane.b32.xlu0 %v1605, 112
        %v1608 = vpop.permute.xlu0 %1607
        %v1609 = vrot.slane %v1608, 2
        %v1610 = vsel %vm494, %v1608, %v1609
        %v1612 = vadd.f32 %v1590, %v1610
        %s1613 = sld [smem:[#allocation7 + $0x14]]
        %s1614 = sld [smem:[#allocation7 + $0x45]]
        %v1615 = vstv %s1613
        %v1616 = vstv %s1614
        %v1617 = vsel %vm457, %v1615, %v1616
        %v1620 = vunpack.c.l.s4 269488144
        %v1621 = vunpack.c.0.s8 %v1620
        %v1622 = vlaneseq
        %v1623 = vshrl.u32 %v1622, 7
        %v1624 = vsub.s32 %v1621, %v1623
        %v1625 = vrot.slane %v1617, %v1624
        %v1627 = vmul.f32 %v1579, %v1625
        %1629 = vrot.lane.b32.xlu0 %v1627, 96
        %v1630 = vpop.permute.xlu0 %1629
        %v1631 = vrot.slane %v1630, 2
        %v1632 = vsel %vm517, %v1630, %v1631
        %v1634 = vadd.f32 %v1612, %v1632
        %s1635 = sld [smem:[#allocation7 + $0x1b]]
        %s1636 = sld [smem:[#allocation7 + $0x4c]]
        %v1637 = vstv %s1635
        %v1638 = vstv %s1636
        %v1639 = vsel %vm457, %v1637, %v1638
        %v1640 = vld [vmem:[#allocation2 + $0x2] sm:$0x3f]
        %v1643 = vunpack.c.l.s4 269488144
        %v1644 = vunpack.c.0.s8 %v1643
        %v1645 = vlaneseq
        %v1646 = vshrl.u32 %v1645, 7
        %v1647 = vsub.s32 %v1644, %v1646
        %v1648 = vrot.slane %v1639, %v1647
        %v1650 = vmul.f32 %v1640, %v1648
        %1652 = vrot.lane.b32.xlu0 %v1650, 80
        %v1653 = vpop.permute.xlu0 %1652
        %v1654 = vrot.slane %v1653, 6
        %v1655 = vsel %vm540, %v1654, %v1653
        %v1657 = vadd.f32 %v1634, %v1655
        %s1658 = sld [smem:[#allocation7 + $0x22]]
        %s1659 = sld [smem:[#allocation7 + $0x53]]
        %v1660 = vstv %s1658
        %v1661 = vstv %s1659
        %v1662 = vsel %vm457, %v1660, %v1661
        %v1665 = vunpack.c.l.s4 269488144
        %v1666 = vunpack.c.0.s8 %v1665
        %v1667 = vlaneseq
        %v1668 = vshrl.u32 %v1667, 7
        %v1669 = vsub.s32 %v1666, %v1668
        %v1670 = vrot.slane %v1662, %v1669
        %v1672 = vmul.f32 %v1640, %v1670
        %1674 = vrot.lane.b32.xlu0 %v1672, 64
        %v1675 = vpop.permute.xlu0 %1674
        %v1676 = vrot.slane %v1675, 6
        %v1677 = vsel %vm564, %v1676, %v1675
        %v1679 = vadd.f32 %v1657, %v1677
        %s1680 = sld [smem:[#allocation7 + $0x29]]
        %s1681 = sld [smem:[#allocation7 + $0x5a]]
        %v1682 = vstv %s1680
        %v1683 = vstv %s1681
        %v1684 = vsel %vm457, %v1682, %v1683
        %v1687 = vunpack.c.l.s4 269488144
        %v1688 = vunpack.c.0.s8 %v1687
        %v1689 = vlaneseq
        %v1690 = vshrl.u32 %v1689, 7
        %v1691 = vsub.s32 %v1688, %v1690
        %v1692 = vrot.slane %v1684, %v1691
        %v1694 = vmul.f32 %v1640, %v1692
        %1696 = vrot.lane.b32.xlu0 %v1694, 48
        %v1697 = vpop.permute.xlu0 %1696
        %v1698 = vrot.slane %v1697, 6
        %v1699 = vsel %vm587, %v1698, %v1697
        %v1701 = vadd.f32 %v1679, %v1699
        %s1702 = sld [smem:[#allocation7 + $0x30]]
        %s1703 = sld [smem:[#allocation7 + $0x61]]
        %v1704 = vstv %s1702
        %v1705 = vstv %s1703
        %v1706 = vsel %vm457, %v1704, %v1705
        %v1709 = vunpack.c.l.s4 269488144
        %v1710 = vunpack.c.0.s8 %v1709
        %v1711 = vlaneseq
        %v1712 = vshrl.u32 %v1711, 7
        %v1713 = vsub.s32 %v1710, %v1712
        %v1714 = vrot.slane %v1706, %v1713
        %v1716 = vmul.f32 %v1640, %v1714
        %1718 = vrot.lane.b32.xlu0 %v1716, 32
        %v1719 = vpop.permute.xlu0 %1718
        %v1720 = vrot.slane %v1719, 6
        %v1721 = vsel %vm610, %v1720, %v1719
        %v1723 = vadd.f32 %v1701, %v1721
        %v1724 = vsel %vm453, 1, 0
        %v1725 = vsel %vm454, 1, 0
        %vm1726 = vcmp.eq.s32.totalorder %v1724, 1
        %vm1727 = vcmp.eq.s32.totalorder %v1725, 1
        %v1729 = vcombine.high %v1723, %v1723
        %v1731 = vunpack.c.l.s4 1983009808
        %v1732 = vunpack.c.0.s8 %v1731
        %v1733 = vlaneseq
        %v1734 = vshrl.u32 %v1733, 7
        %v1735 = vsub.s32 %v1732, %v1734
        %v1736 = vrot.slane %v1723, %v1735
        %v1738 = vunpack.c.l.s4 1983009808
        %v1739 = vunpack.c.0.s8 %v1738
        %v1740 = vlaneseq
        %v1741 = vshrl.u32 %v1740, 7
        %v1742 = vsub.s32 %v1739, %v1741
        %v1743 = vrot.slane %v1729, %v1742
        %v1744 = vcombine.high %v1736, %v1736
        %1745 = vrot.lane.b32.xlu0 %v1736, 45
        %v1746 = vpop.permute.xlu0 %1745
        %1747 = vrot.lane.b32.xlu0 %v1744, 45
        %v1748 = vpop.permute.xlu0 %1747
        %1749 = vrot.lane.b32.xlu0 %v1743, 45
        %v1750 = vpop.permute.xlu0 %1749
        %vm1751 = vcmask 367616
        %v1752 = vsel %vm1751, %v1746, %v1748
        %v1753 = vsel %vm1751, %v1748, %v1750
        %v1756 = vsel %vm1726, %v1752, 0.0
        %v1757 = vsel %vm1727, %v1753, 0.0
        %v1758 = vadd.f32 %v1572, %v1756
        %v1759 = vadd.f32 %v1573, %v1757
        %v1762 = vrot.slane %v1758, 1
        %v1763 = vrot.slane %v1759, 1
        %v1766 = vadd.f32 %v1758, %v1762
        %v1767 = vadd.f32 %v1759, %v1763
        %v1768 = vmul.f32 %v1766, 0.5
        %v1769 = vmul.f32 %v1767, 0.5
        %v1770 = vtanh.pop %v1768
        %v1771 = vtanh.pop %v1769
        %v1772 = vadd.f32 %v1770, 1.0
        %v1773 = vadd.f32 %v1771, 1.0
        %v1774 = vmul.f32 %v1772, 0.5
        %v1775 = vmul.f32 %v1773, 0.5
        %v1776 = vld [vmem:[%s200] sm:$0xff]
        %v1777 = vld [vmem:[%s200 + $0x8] sm:$0xff]
        %v1778 = vld [vmem:[%s200 + $0x10] sm:$0xff]
        %v1779 = vld [vmem:[%s200 + $0x18] sm:$0xff]
        %v1780 = vld [vmem:[%s200 + $0x20] sm:$0xff]
        %v1781 = vld [vmem:[%s200 + $0x28] sm:$0xff]
        %v1782 = vld [vmem:[%s200 + $0x30] sm:$0xff]
        %v1783 = vld [vmem:[%s200 + $0x38] sm:$0xff]
        %v1784 = vmul.f32 %v1776, %v343
        %v1785 = vmul.f32 %v1777, %v343
        %v1786 = vmul.f32 %v1778, %v344
        %v1787 = vmul.f32 %v1779, %v344
        %v1788 = vmul.f32 %v1780, %v345
        %v1789 = vmul.f32 %v1781, %v345
        %v1790 = vmul.f32 %v1782, %v346
        %v1791 = vmul.f32 %v1783, %v346
        %v1792 = vlaneseq
        %v1793 = vshrl.u32 %v1792, 7
        %v1794 = vsub.s32 0, %v1793
        %v1795 = vrot.slane %v1774, %v1794
        %v1796 = vlaneseq
        %v1797 = vshrl.u32 %v1796, 7
        %v1798 = vsub.s32 0, %v1797
        %v1799 = vrot.slane %v1775, %v1798
        %v1800 = vmul.f32 %v1784, %v1795
        %v1801 = vmul.f32 %v1785, %v1799
        %v1802 = vmul.f32 %v1786, %v1795
        %v1803 = vmul.f32 %v1787, %v1799
        %v1804 = vmul.f32 %v1788, %v1795
        %v1805 = vmul.f32 %v1789, %v1799
        %v1806 = vmul.f32 %v1790, %v1795
        %v1807 = vmul.f32 %v1791, %v1799
        %1808 = vst [vmem:[%s229] sm:$0xff] %v1800
        %1809 = vst [vmem:[%s229 + $0x8] sm:$0xff] %v1801
        %1810 = vst [vmem:[%s229 + $0x10] sm:$0xff] %v1802
        %1811 = vst [vmem:[%s229 + $0x18] sm:$0xff] %v1803
        %1812 = vst [vmem:[%s229 + $0x20] sm:$0xff] %v1804
        %1813 = vst [vmem:[%s229 + $0x28] sm:$0xff] %v1805
        %1814 = vst [vmem:[%s229 + $0x30] sm:$0xff] %v1806
        %1815 = vst [vmem:[%s229 + $0x38] sm:$0xff] %v1807
        %s1816 = sand.u32 %s119, 1
        %s1817 = scalar_lea.sflag [#allocation5], %s1816
        %s1818 = sand.u32 %s119, 1
        %s1819 = smul.addr %s1818, 64
        %s1820 = scalar_lea.vmem [#allocation8], %s1819
        // Predicated region
        $region45: #{tpu_custom_call.1} parent=35 // pred_check
          %p1821 = pneg %p129
        $region46: #{tpu_custom_call.1} parent=35 // pred_check_branch
          %1823 = sbr.rel (%p1821) target = $region48
        $region47: #{tpu_custom_call.1} parent=35 // pred_region
          %s1825 = ssub.s32 1024, 1024
          %1826 = vsyncadd %s1817, %s1825
          %s1827 = smul.addr %s22, 8
          %s1828 = smul.addr %s1827, 128
          %s1829 = scalar_lea.hbm %s4, %s1828
          %s1830 = sshll.u32 %s1820, 4
          %s1831 = int_to_ptr.vmem [resolvable:$true] %s1830
          %1836 = dma.vmem_to_hbm [thread:$0]  %s1831, 1024, %s1829, %s1817, 256, 256, 16
        $region48: #{tpu_custom_call.1} parent=35 // pred_fallthru
          _
      $region36: #{tpu_custom_call.1} parent=5 // pred_fallthru
        _
      %p1837 = scmp.le.s32.totalorder 2, %s17
      // Predicated region
      $region49: #{tpu_custom_call.1} parent=5 // pred_check
        %p1838 = pneg %p1837
      $region50: #{tpu_custom_call.1} parent=5 // pred_check_branch
        %1840 = sbr.rel (%p1838) target = $region52
      $region51: #{tpu_custom_call.1} parent=5 // pred_region
        %s1841 = ssub.s32 %s17, 2
        // Predicated region
        $region53: #{tpu_custom_call.1} parent=51 // pred_check
          %p1842 = pneg %p135
        $region54: #{tpu_custom_call.1} parent=51 // pred_check_branch
          %1844 = sbr.rel (%p1842) target = $region56
        $region55: #{tpu_custom_call.1} parent=51 // pred_region
          %s1845 = sand.u32 %s120, 1
          %s1846 = scalar_lea.sflag [#allocation5], %s1845
          %s1847 = sand.u32 %s120, 1
          %s1848 = smul.addr %s1847, 64
          %s1849 = scalar_lea.vmem [#allocation8], %s1848
          %1850 = dma.done %s1846, 1024
        $region56: #{tpu_custom_call.1} parent=51 // pred_fallthru
          _
      $region52: #{tpu_custom_call.1} parent=5 // pred_fallthru
        _
    $region6: #{tpu_custom_call.1} parent=1 // loop_footer
      %s21 = sadd.s32 1, %s17
    $region7: #{tpu_custom_call.1} parent=1 // loop_footer_branch
      %16 = sbr.rel target = $region3
    $region8: #{tpu_custom_call.1} parent=1 // loop_exit
      _
    %1851 = vsyncpa [#allocation4], 1
    %s1852 = scalar_lea.sflag [#allocation4], 1
    %1853 = vsyncpa %s1852, 1
    %1854 = vsyncpa [#allocation5], 1
    %s1855 = scalar_lea.sflag [#allocation5], 1
    %1856 = vsyncpa %s1855, 1
    %1857 = vsyncpa [#allocation6], 1
    %s1858 = scalar_lea.sflag [#allocation6], 1
    %1859 = vsyncpa %s1858, 1

</llo_original>
